<compile_context>
chip_gen: v6e
topology: v6e:2x2x1
jax: 0.10.0
libtpu: 0.0.40
codegen_flags: <defaults>
</compile_context>

<pallas_src>
import functools

import jax
import jax.numpy as jnp
from jax import lax
from jax.experimental import pallas as pl
from jax.experimental.pallas import tpu as pltpu


# ----------------------------------------------------------------------------
# helpers
# ----------------------------------------------------------------------------
def _round_up(a, b):
    return (a + b - 1) // b * b


def _pick_tile_m(M, row_bytes, budget_bytes=16 * 1024 * 1024):
    """Largest pixel tile (<=1024 rows, mult of 8) whose double-buffered streams fit."""
    tm = 1024
    while tm > 8 and tm * row_bytes > budget_bytes:
        tm //= 2
    return max(8, min(tm, _round_up(M, 8)))


# ----------------------------------------------------------------------------
# Pallas kernel 1: fused pre-NMF chain
#   concat(features) -> squeeze(ConvReLU) -> lower_bread(conv+bias+ReLU)
#   (concat is virtual: squeeze = sum of per-feature partial matmuls)
# ----------------------------------------------------------------------------
def _pre_chain_kernel(*refs, n_feats):
    x_refs = refs[:n_feats]
    w_refs = refs[n_feats:2 * n_feats]
    w_lo_ref, b_lo_ref, skip_ref, y_ref = refs[2 * n_feats:]
    # squeeze: relu(sum_k x_k @ w_sq_k)   (bf16 operands, f32 MXU accumulation)
    h = jnp.dot(x_refs[0][...], w_refs[0][...], preferred_element_type=jnp.float32)
    for k in range(1, n_feats):
        h = h + jnp.dot(x_refs[k][...], w_refs[k][...], preferred_element_type=jnp.float32)
    h = jnp.maximum(h, 0.0).astype(jnp.bfloat16)
    skip_ref[...] = h
    # lower_bread: relu(h @ w_lo + b_lo)
    y = jnp.dot(h, w_lo_ref[...], preferred_element_type=jnp.float32)
    y_ref[...] = jnp.maximum(y + b_lo_ref[...], 0.0).astype(y_ref.dtype)


def fused_pre_chain(x_feats, w_sq_splits, w_lo, b_lo, *, tm):
    M = x_feats[0].shape[0]
    ham = w_lo.shape[0]
    n = len(x_feats)
    cin = sum(x.shape[1] for x in x_feats)
    grid = (pl.cdiv(M, tm),)
    # TODO(synk): mark resident-weight specs pipeline_mode=pl.Buffered(1) once the
    # top-level pallas_call pipeline honors it; left default to keep lowering safe.
    in_specs = (
        [pl.BlockSpec((tm, x.shape[1]), lambda i: (i, 0)) for x in x_feats]
        + [pl.BlockSpec(w.shape, lambda i: (0, 0)) for w in w_sq_splits]   # resident
        + [pl.BlockSpec((ham, ham), lambda i: (0, 0)),
           pl.BlockSpec((1, ham), lambda i: (0, 0))])
    flops = 2 * M * ham * (cin + ham)
    bytes_acc = 2 * (M * cin + 2 * M * ham + cin * ham + ham * ham) + 4 * ham
    skip, y = pl.pallas_call(
        functools.partial(_pre_chain_kernel, n_feats=n),
        out_shape=(jax.ShapeDtypeStruct((M, ham), jnp.bfloat16),
                   jax.ShapeDtypeStruct((M, ham), jnp.bfloat16)),
        grid_spec=pltpu.PrefetchScalarGridSpec(
            num_scalar_prefetch=0,
            grid=grid,
            in_specs=in_specs,
            out_specs=[pl.BlockSpec((tm, ham), lambda i: (i, 0)),
                       pl.BlockSpec((tm, ham), lambda i: (i, 0))]),
        compiler_params=pltpu.CompilerParams(
            dimension_semantics=("parallel",),
            vmem_limit_bytes=32 * 1024 * 1024),
        cost_estimate=pl.CostEstimate(flops=flops, transcendentals=0,
                                      bytes_accessed=bytes_acc),
    )(*[x.astype(jnp.bfloat16) for x in x_feats],
      *[w.astype(jnp.bfloat16) for w in w_sq_splits],
      w_lo.astype(jnp.bfloat16), b_lo.reshape(1, ham).astype(jnp.float32))
    return skip, y


# ----------------------------------------------------------------------------
# Pallas kernel 2: fused post-NMF chain (cheese -> upper_bread + skip + ReLU -> align)
# ----------------------------------------------------------------------------
def _post_chain_kernel(y_ref, skip_ref, w_ch_ref, w_up_ref, w_al_ref, o_ref, *, put_cheese):
    z = y_ref[...]
    if put_cheese:
        z = jnp.dot(z, w_ch_ref[...], preferred_element_type=jnp.float32)
        z = jnp.maximum(z, 0.0).astype(jnp.bfloat16)
    z = jnp.dot(z, w_up_ref[...], preferred_element_type=jnp.float32)
    z = jnp.maximum(z + skip_ref[...].astype(jnp.float32), 0.0).astype(jnp.bfloat16)
    o = jnp.dot(z, w_al_ref[...], preferred_element_type=jnp.float32)
    o_ref[...] = jnp.maximum(o, 0.0).astype(o_ref.dtype)


def fused_post_chain(y_rec, skip, w_ch, w_up, w_al, out_ch, *, put_cheese, tm):
    M, ham = y_rec.shape
    outc_pad = _round_up(out_ch, 128)                      # lane-dense output store
    w_al_p = jnp.pad(w_al.astype(jnp.bfloat16), ((0, 0), (0, outc_pad - out_ch)))
    grid = (pl.cdiv(M, tm),)
    n_mm = 2 if put_cheese else 1
    flops = 2 * M * ham * (n_mm * ham + outc_pad)
    bytes_acc = 2 * (2 * M * ham + 2 * ham * ham + ham * outc_pad) + 4 * M * outc_pad
    out = pl.pallas_call(
        functools.partial(_post_chain_kernel, put_cheese=put_cheese),
        out_shape=jax.ShapeDtypeStruct((M, outc_pad), jnp.float32),
        grid_spec=pltpu.PrefetchScalarGridSpec(
            num_scalar_prefetch=0,
            grid=grid,
            in_specs=[
                pl.BlockSpec((tm, ham), lambda i: (i, 0)),
                pl.BlockSpec((tm, ham), lambda i: (i, 0)),
                pl.BlockSpec((ham, ham), lambda i: (0, 0)),        # resident weights
                pl.BlockSpec((ham, ham), lambda i: (0, 0)),
                pl.BlockSpec((ham, outc_pad), lambda i: (0, 0)),
            ],
            out_specs=pl.BlockSpec((tm, outc_pad), lambda i: (i, 0))),
        compiler_params=pltpu.CompilerParams(
            dimension_semantics=("parallel",),
            vmem_limit_bytes=32 * 1024 * 1024),
        cost_estimate=pl.CostEstimate(flops=flops, transcendentals=0,
                                      bytes_accessed=bytes_acc),
    )(y_rec, skip, w_ch.astype(jnp.bfloat16), w_up.astype(jnp.bfloat16), w_al_p)
    return out          # (M, outc_pad); channel slice fuses into the consumer transpose


# ----------------------------------------------------------------------------
# Pallas kernel 3: NMF2D multiplicative updates, pixel-major, one batch-slice per step
# ----------------------------------------------------------------------------
def _nmf_kernel(x_ref, bases_ref, o_ref, *, steps, inv_t, rank):
    x = x_ref[0]                              # (N, D) bf16 — never upcast / transposed
    bases = bases_ref[0]                      # (D, Rp) f32, padded rank columns are zero

    def mm(a, b):
        return jnp.dot(a, b, preferred_element_type=jnp.float32)

    def mm_c0(a, b):  # a^T @ b without materializing a^T (contraction over dim 0)
        return lax.dot_general(a, b, (((0,), (0,)), ((), ())),
                               preferred_element_type=jnp.float32)

    # coef init: softmax(inv_t * x @ bases, axis=-1); padded rank columns masked to -inf
    logits = inv_t * mm(x, bases.astype(jnp.bfloat16))            # (N, Rp) f32
    if logits.shape[-1] != rank:
        col = lax.broadcasted_iota(jnp.int32, logits.shape, 1)
        logits = jnp.where(col < rank, logits, -jnp.inf)
    coef = jax.nn.softmax(logits, axis=-1)                        # (N, Rp) f32

    def coef_update(bases, coef):
        num = mm(x, bases.astype(jnp.bfloat16))                   # (N, Rp) bf16 MXU
        den = mm(coef, mm_c0(bases, bases))                       # (N, Rp) f32
        return coef * num / (den + 1e-6)                          # exact division

    # multiplicative updates; steps is a compile-time constant -> fully unrolled
    for _ in range(steps):
        coef = coef_update(bases, coef)
        num = mm_c0(x, coef.astype(jnp.bfloat16))                 # (D, Rp) = x^T @ coef
        den = mm(bases, mm_c0(coef, coef))                        # (D, Rp)
        bases = bases * num / (den + 1e-6)

    # compute_coef: one final coef update with frozen bases
    coef = coef_update(bases, coef)

    # reconstruction, pixel-major: (N, D) = coef @ bases^T (padded rank cols contribute 0)
    recon = lax.dot_general(coef.astype(jnp.bfloat16), bases.astype(jnp.bfloat16),
                            (((1,), (1,)), ((), ())),
                            preferred_element_type=jnp.float32)
    o_ref[0] = recon.astype(o_ref.dtype)


def nmf2d(x_bnd, bases0, *, steps, inv_t, rank):
    """x_bnd: (B*S, N, D) pixel-major, bases0: (B*S, D, Rp) f32 rank-padded. -> bf16."""
    BS, N, D = x_bnd.shape
    Rp = bases0.shape[-1]
    flops = (BS * 2 * N * D * Rp * (2 * steps + 3)
             + BS * 2 * (N + D) * Rp * Rp * (2 * steps + 1))
    # TODO(synk): for very large N*D tile N inside the kernel (pltpu.emit_pipeline) and,
    # when B*S == 1, split N over a second parallel grid axis so both v7x cores work.
    return pl.pallas_call(
        functools.partial(_nmf_kernel, steps=steps, inv_t=inv_t, rank=rank),
        out_shape=jax.ShapeDtypeStruct((BS, N, D), jnp.bfloat16),
        grid_spec=pltpu.PrefetchScalarGridSpec(
            num_scalar_prefetch=0,
            grid=(BS,),
            in_specs=[
                pl.BlockSpec((1, N, D), lambda b: (b, 0, 0)),
                pl.BlockSpec((1, D, Rp), lambda b: (b, 0, 0)),
            ],
            out_specs=pl.BlockSpec((1, N, D), lambda b: (b, 0, 0))),
        compiler_params=pltpu.CompilerParams(
            dimension_semantics=("parallel",),
            vmem_limit_bytes=40 * 1024 * 1024),
        cost_estimate=pl.CostEstimate(flops=flops, transcendentals=BS * N * Rp,
                                      bytes_accessed=BS * (2 * 2 * N * D + 4 * D * Rp)),
    )(x_bnd.astype(jnp.bfloat16), bases0.astype(jnp.float32))


# ----------------------------------------------------------------------------
# Glue (plain JAX): bilinear resize (torch align_corners=False), layout plumbing
# ----------------------------------------------------------------------------
def resize_bilinear(x, out_h, out_w):
    """x: (B, H, W, C) -> (B, out_h, out_w, C); matches torch bilinear, align_corners=False."""
    B, H, W, C = x.shape
    if (H, W) == (out_h, out_w):
        return x
    ys = jnp.maximum((jnp.arange(out_h, dtype=jnp.float32) + 0.5) * (H / out_h) - 0.5, 0.0)
    xs = jnp.maximum((jnp.arange(out_w, dtype=jnp.float32) + 0.5) * (W / out_w) - 0.5, 0.0)
    y0 = jnp.clip(jnp.floor(ys).astype(jnp.int32), 0, H - 1)
    x0 = jnp.clip(jnp.floor(xs).astype(jnp.int32), 0, W - 1)
    y1 = jnp.minimum(y0 + 1, H - 1)
    x1 = jnp.minimum(x0 + 1, W - 1)
    wy = (ys - y0.astype(jnp.float32))[None, :, None, None]
    wx = (xs - x0.astype(jnp.float32))[None, None, :, None]

    def g(yi, xi):
        return jnp.take(jnp.take(x, yi, axis=1), xi, axis=2)

    top = (1.0 - wx) * g(y0, x0) + wx * g(y0, x1)
    bot = (1.0 - wx) * g(y1, x0) + wx * g(y1, x1)
    return (1.0 - wy) * top + wy * bot


def init_params(key, in_ch, ham, out_ch):
    ks = jax.random.split(key, 6)
    s = 0.05
    return dict(
        w_squeeze=jax.random.normal(ks[0], (in_ch, ham), jnp.float32) * s,  # ConvRelu (no bias)
        w_lower=jax.random.normal(ks[1], (ham, ham), jnp.float32) * s,      # lower_bread (bias)
        b_lower=jax.random.normal(ks[2], (ham,), jnp.float32) * s,
        w_cheese=jax.random.normal(ks[3], (ham, ham), jnp.float32) * s,     # cheese ConvRelu
        w_upper=jax.random.normal(ks[4], (ham, ham), jnp.float32) * s,      # upper_bread
        w_align=jax.random.normal(ks[5], (ham, out_ch), jnp.float32) * s,   # align ConvRelu
    )


def ham_decoder_forward(features_nchw, params, config, bases_key):
    """features_nchw: list of 4 NCHW feature maps (like the PyTorch module). Returns NCHW."""
    ham = config["ham_channels"]
    S = config["MD_S"]
    R = config["MD_R"]
    out_ch = params["w_align"].shape[1]

    # features = features[1:]; resize all to features[-3] spatial size
    feats = [jnp.transpose(f, (0, 2, 3, 1)) for f in features_nchw[1:]]   # NHWC
    H, W = feats[0].shape[1:3]
    feats = [resize_bilinear(f, H, W) for f in feats]
    B = feats[0].shape[0]
    N = H * W
    M = B * N
    ck = [f.shape[-1] for f in feats]
    x_feats = [f.reshape(M, c) for f, c in zip(feats, ck)]   # concat fused into kernel

    # per-feature row-slices of the squeeze weight (tiny host-side slices)
    w_sq_splits, off = [], 0
    for c in ck:
        w_sq_splits.append(params["w_squeeze"][off:off + c])
        off += c

    # shared VMEM-budgeted pixel tiling; per-row bytes count each double-buffered stream
    outc_pad = _round_up(out_ch, 128)
    row_pre = 2 * 2 * sum(ck) + 2 * 2 * (2 * ham)           # bf16 inputs + 2 bf16 outputs
    row_post = 2 * 2 * (2 * ham) + 2 * 4 * outc_pad         # 2 bf16 inputs + f32 output
    tm = _pick_tile_m(M, max(row_pre, row_post))

    # squeeze + lower_bread (fused Pallas kernel, no HBM concat / pixel pad)
    skip, y = fused_pre_chain(x_feats, w_sq_splits, params["w_lower"],
                              params["b_lower"], tm=tm)

    # NMF2D on pixel-major (B*S, N, D) — same math as torch x.view(B*S, D, H*W)
    D = ham // S
    Rp = _round_up(R, 128)                                   # lane/MXU-friendly rank
    y_g = y.reshape(B, N, S, D)
    y_g = jnp.transpose(y_g, (0, 2, 1, 3)).reshape(B * S, N, D)
    bases0 = jax.random.uniform(bases_key, (B * S, D, R), jnp.float32)     # rand_init bases
    bases0 = bases0 / jnp.maximum(
        jnp.sqrt(jnp.sum(bases0 * bases0, axis=1, keepdims=True)), 1e-12)  # F.normalize(dim=1)
    bases0 = jnp.pad(bases0, ((0, 0), (0, 0), (0, Rp - R)))                # zero rank padding
    y_rec = nmf2d(y_g, bases0, steps=config["EVAL_STEPS"], inv_t=config["INV_T"], rank=R)
    y_rec = jnp.transpose(y_rec.reshape(B, S, N, D), (0, 2, 1, 3)).reshape(M, ham)

    # cheese + upper_bread(+skip+ReLU) + align (fused Pallas kernel, lane-dense out)
    out = fused_post_chain(y_rec, skip, params["w_cheese"], params["w_upper"],
                           params["w_align"], out_ch,
                           put_cheese=config["put_cheese"], tm=tm)

    # channel slice fuses with the NHWC->NCHW transpose into one XLA copy
    out = out.reshape(B, H, W, outc_pad)[..., :out_ch]
    return jnp.transpose(out, (0, 3, 1, 2))                                # back to NCHW


if __name__ == "__main__":
    key = jax.random.PRNGKey(0)

    B = 2
    enc_embed_dims = [8, 16, 24, 24]           # small, stands in for [32, 64, 460, 256]
    spatial = [(32, 32), (16, 16), (8, 8), (4, 4)]
    out_channels = 16
    config = dict(ham_channels=32, put_cheese=True,
                  MD_S=1, MD_R=8, EVAL_STEPS=7, INV_T=1.0)

    k_feat, k_par, k_bases = jax.random.split(key, 3)
    fkeys = jax.random.split(k_feat, len(enc_embed_dims))
    features = [
        jax.random.normal(fk, (B, c, h, w), jnp.float32)
        for fk, c, (h, w) in zip(fkeys, enc_embed_dims, spatial)
    ]

    in_ch = sum(enc_embed_dims[1:])
    params = init_params(k_par, in_ch, config["ham_channels"], out_channels)

    out = ham_decoder_forward(features, params, config, k_bases)
    out = jax.block_until_ready(out)

    assert out.shape == (B, out_channels, spatial[1][0], spatial[1][1]), out.shape
    assert out.dtype == jnp.float32
    assert bool(jnp.all(jnp.isfinite(out)))
    print("KERNEL_OK")
</pallas_src>

<mosaic_0001>
module attributes {stable_mosaic.version = 11 : i64} {
  func.func @_pre_chain_kernel(%arg0: i32, %arg1: memref<512x16xbf16, #tpu.memory_space<vmem>>, %arg2: memref<512x24xbf16, #tpu.memory_space<vmem>>, %arg3: memref<512x24xbf16, #tpu.memory_space<vmem>>, %arg4: memref<16x32xbf16, #tpu.memory_space<vmem>>, %arg5: memref<24x32xbf16, #tpu.memory_space<vmem>>, %arg6: memref<24x32xbf16, #tpu.memory_space<vmem>>, %arg7: memref<32x32xbf16, #tpu.memory_space<vmem>>, %arg8: memref<1x32xf32, #tpu.memory_space<vmem>>, %arg9: memref<512x32xbf16, #tpu.memory_space<vmem>>, %arg10: memref<512x32xbf16, #tpu.memory_space<vmem>>) attributes {dimension_semantics = [#tpu.dimension_semantics<parallel>], iteration_bounds = array<i64: 1>, scalar_prefetch = 0 : i64, scratch_operands = 0 : i64, tpu.core_type = #tpu.core_type<tc>, window_params = [{transform_indices = @transform_0, window_bounds = array<i64: 512, 16>}, {transform_indices = @transform_1, window_bounds = array<i64: 512, 24>}, {transform_indices = @transform_2, window_bounds = array<i64: 512, 24>}, {pipeline_mode = #tpu.pipeline_mode<synchronous>, transform_indices = @transform_3, window_bounds = array<i64: 16, 32>}, {pipeline_mode = #tpu.pipeline_mode<synchronous>, transform_indices = @transform_4, window_bounds = array<i64: 24, 32>}, {pipeline_mode = #tpu.pipeline_mode<synchronous>, transform_indices = @transform_5, window_bounds = array<i64: 24, 32>}, {pipeline_mode = #tpu.pipeline_mode<synchronous>, transform_indices = @transform_6, window_bounds = array<i64: 32, 32>}, {pipeline_mode = #tpu.pipeline_mode<synchronous>, transform_indices = @transform_7, window_bounds = array<i64: 1, 32>}, {transform_indices = @transform_8, window_bounds = array<i64: 512, 32>}, {transform_indices = @transform_9, window_bounds = array<i64: 512, 32>}]} {
    %c0 = arith.constant 0 : index
    %c0_0 = arith.constant 0 : index
    %0 = vector.load %arg1[%c0, %c0_0] : memref<512x16xbf16, #tpu.memory_space<vmem>>, vector<512x16xbf16>
    %c0_1 = arith.constant 0 : index
    %c0_2 = arith.constant 0 : index
    %1 = vector.load %arg4[%c0_1, %c0_2] : memref<16x32xbf16, #tpu.memory_space<vmem>>, vector<16x32xbf16>
    %cst = arith.constant dense<0.000000e+00> : vector<512x32xf32>
    %2 = tpu.matmul %0, %1, %cst {dimension_numbers = #tpu.dot_dimension_numbers<[1], [0], [0], [1], [0, 0, 1, 1], [], []>} : vector<512x16xbf16>, vector<16x32xbf16>, vector<512x32xf32> -> vector<512x32xf32>
    %c0_3 = arith.constant 0 : index
    %c0_4 = arith.constant 0 : index
    %3 = vector.load %arg2[%c0_3, %c0_4] : memref<512x24xbf16, #tpu.memory_space<vmem>>, vector<512x24xbf16>
    %c0_5 = arith.constant 0 : index
    %c0_6 = arith.constant 0 : index
    %4 = vector.load %arg5[%c0_5, %c0_6] : memref<24x32xbf16, #tpu.memory_space<vmem>>, vector<24x32xbf16>
    %cst_7 = arith.constant dense<0.000000e+00> : vector<512x32xf32>
    %5 = tpu.matmul %3, %4, %cst_7 {dimension_numbers = #tpu.dot_dimension_numbers<[1], [0], [0], [1], [0, 0, 1, 1], [], []>} : vector<512x24xbf16>, vector<24x32xbf16>, vector<512x32xf32> -> vector<512x32xf32>
    %6 = arith.addf %2, %5 : vector<512x32xf32>
    %c0_8 = arith.constant 0 : index
    %c0_9 = arith.constant 0 : index
    %7 = vector.load %arg3[%c0_8, %c0_9] : memref<512x24xbf16, #tpu.memory_space<vmem>>, vector<512x24xbf16>
    %c0_10 = arith.constant 0 : index
    %c0_11 = arith.constant 0 : index
    %8 = vector.load %arg6[%c0_10, %c0_11] : memref<24x32xbf16, #tpu.memory_space<vmem>>, vector<24x32xbf16>
    %cst_12 = arith.constant dense<0.000000e+00> : vector<512x32xf32>
    %9 = tpu.matmul %7, %8, %cst_12 {dimension_numbers = #tpu.dot_dimension_numbers<[1], [0], [0], [1], [0, 0, 1, 1], [], []>} : vector<512x24xbf16>, vector<24x32xbf16>, vector<512x32xf32> -> vector<512x32xf32>
    %10 = arith.addf %6, %9 : vector<512x32xf32>
    %cst_13 = arith.constant 0.000000e+00 : f32
    %11 = vector.broadcast %cst_13 : f32 to vector<512x32xf32>
    %12 = arith.maximumf %10, %11 : vector<512x32xf32>
    %13 = arith.truncf %12 : vector<512x32xf32> to vector<512x32xbf16>
    %c0_14 = arith.constant 0 : index
    %c0_15 = arith.constant 0 : index
    %14 = vector.load %arg9[%c0_14, %c0_15] : memref<512x32xbf16, #tpu.memory_space<vmem>>, vector<512x32xbf16>
    tpu.vector_store %arg9[%c0_14, %c0_15], %13 {strides = array<i32>} : memref<512x32xbf16, #tpu.memory_space<vmem>>, vector<512x32xbf16>,
    %c0_16 = arith.constant 0 : index
    %c0_17 = arith.constant 0 : index
    %15 = vector.load %arg7[%c0_16, %c0_17] : memref<32x32xbf16, #tpu.memory_space<vmem>>, vector<32x32xbf16>
    %cst_18 = arith.constant dense<0.000000e+00> : vector<512x32xf32>
    %16 = tpu.matmul %13, %15, %cst_18 {dimension_numbers = #tpu.dot_dimension_numbers<[1], [0], [0], [1], [0, 0, 1, 1], [], []>} : vector<512x32xbf16>, vector<32x32xbf16>, vector<512x32xf32> -> vector<512x32xf32>
    %c0_19 = arith.constant 0 : index
    %c0_20 = arith.constant 0 : index
    %17 = vector.load %arg8[%c0_19, %c0_20] : memref<1x32xf32, #tpu.memory_space<vmem>>, vector<1x32xf32>
    %18 = vector.broadcast %17 : vector<1x32xf32> to vector<512x32xf32>
    %19 = arith.addf %16, %18 : vector<512x32xf32>
    %cst_21 = arith.constant 0.000000e+00 : f32
    %20 = vector.broadcast %cst_21 : f32 to vector<512x32xf32>
    %21 = arith.maximumf %19, %20 : vector<512x32xf32>
    %22 = arith.truncf %21 : vector<512x32xf32> to vector<512x32xbf16>
    %c0_22 = arith.constant 0 : index
    %c0_23 = arith.constant 0 : index
    %23 = vector.load %arg10[%c0_22, %c0_23] : memref<512x32xbf16, #tpu.memory_space<vmem>>, vector<512x32xbf16>
    tpu.vector_store %arg10[%c0_22, %c0_23], %22 {strides = array<i32>} : memref<512x32xbf16, #tpu.memory_space<vmem>>, vector<512x32xbf16>,
    return
  }
  func.func @transform_0(%arg0: i32) -> (i32, i32) {
    %c0_i32 = arith.constant 0 : i32
    %c0_i32_0 = arith.constant 0 : i32
    return %arg0, %c0_i32 : i32, i32
  }
  func.func @transform_1(%arg0: i32) -> (i32, i32) {
    %c0_i32 = arith.constant 0 : i32
    %c0_i32_0 = arith.constant 0 : i32
    return %arg0, %c0_i32 : i32, i32
  }
  func.func @transform_2(%arg0: i32) -> (i32, i32) {
    %c0_i32 = arith.constant 0 : i32
    %c0_i32_0 = arith.constant 0 : i32
    return %arg0, %c0_i32 : i32, i32
  }
  func.func @transform_3(%arg0: i32) -> (i32, i32) {
    %c0_i32 = arith.constant 0 : i32
    %c0_i32_0 = arith.constant 0 : i32
    %c0_i32_1 = arith.constant 0 : i32
    return %c0_i32, %c0_i32_0 : i32, i32
  }
  func.func @transform_4(%arg0: i32) -> (i32, i32) {
    %c0_i32 = arith.constant 0 : i32
    %c0_i32_0 = arith.constant 0 : i32
    %c0_i32_1 = arith.constant 0 : i32
    return %c0_i32, %c0_i32_0 : i32, i32
  }
  func.func @transform_5(%arg0: i32) -> (i32, i32) {
    %c0_i32 = arith.constant 0 : i32
    %c0_i32_0 = arith.constant 0 : i32
    %c0_i32_1 = arith.constant 0 : i32
    return %c0_i32, %c0_i32_0 : i32, i32
  }
  func.func @transform_6(%arg0: i32) -> (i32, i32) {
    %c0_i32 = arith.constant 0 : i32
    %c0_i32_0 = arith.constant 0 : i32
    %c0_i32_1 = arith.constant 0 : i32
    return %c0_i32, %c0_i32_0 : i32, i32
  }
  func.func @transform_7(%arg0: i32) -> (i32, i32) {
    %c0_i32 = arith.constant 0 : i32
    %c0_i32_0 = arith.constant 0 : i32
    %c0_i32_1 = arith.constant 0 : i32
    return %c0_i32, %c0_i32_0 : i32, i32
  }
  func.func @transform_8(%arg0: i32) -> (i32, i32) {
    %c0_i32 = arith.constant 0 : i32
    %c0_i32_0 = arith.constant 0 : i32
    return %arg0, %c0_i32 : i32, i32
  }
  func.func @transform_9(%arg0: i32) -> (i32, i32) {
    %c0_i32 = arith.constant 0 : i32
    %c0_i32_0 = arith.constant 0 : i32
    return %arg0, %c0_i32 : i32, i32
  }
}

</mosaic_0001>

<llo_original>
// kernel: tpu_custom_call.1
$region0: #{tpu_custom_call.1}
  #allocation0 [shape = 'u32[]', space=smem, size = 0x4, offset = 0x4, fixed_abs, tag = 'smem constant byte address 0x4 - core index']
  #allocation1 [shape = 'u32[144,128]{1,0:T(1,128)}', space=vmem, size = 0x12000, scoped, tag = 'internal scratch']
  %s0 = inlined_call_operand.vmem [shape: bf16[512,16], index: 0, kind: input, shape index: {}]
  %s1 = inlined_call_operand.vmem [shape: bf16[512,24], index: 1, kind: input, shape index: {}]
  %s2 = inlined_call_operand.vmem [shape: bf16[512,24], index: 2, kind: input, shape index: {}]
  %s3 = inlined_call_operand.vmem [shape: bf16[16,32], index: 3, kind: input, shape index: {}]
  %s4 = inlined_call_operand.vmem [shape: bf16[24,32], index: 4, kind: input, shape index: {}]
  %s5 = inlined_call_operand.vmem [shape: bf16[24,32], index: 5, kind: input, shape index: {}]
  %s6 = inlined_call_operand.vmem [shape: bf16[32,32], index: 6, kind: input, shape index: {}]
  %s7 = inlined_call_operand.vmem [shape: f32[1,32], index: 7, kind: input, shape index: {}]
  %s8 = inlined_call_operand.vmem [shape: bf16[512,32], index: 8, kind: output, shape index: {0}]
  %s9 = inlined_call_operand.vmem [shape: bf16[512,32], index: 9, kind: output, shape index: {1}]
  %10 = xla_tuple %s8, %s9
  %s11 = sld [smem:[#allocation0]]
  $region50: #{tpu_custom_call.1} parent=0
    _
  %s13 = ssub.s32 1, %s11
  %s14 = scalar_select 0, %s13, %s11
  // Predicated region
  $region2: #{tpu_custom_call.1} parent=0 // pred_check
    _
  $region3: #{tpu_custom_call.1} parent=0 // pred_check_branch
    %16 = sbr.rel (0) target = $region5
  $region4: #{tpu_custom_call.1} parent=0 // pred_region
    _
  $region5: #{tpu_custom_call.1} parent=0 // pred_fallthru
    _
  // Predicated region
  $region6: #{tpu_custom_call.1} parent=0 // pred_check
    _
  $region7: #{tpu_custom_call.1} parent=0 // pred_check_branch
    %18 = sbr.rel (0) target = $region9
  $region8: #{tpu_custom_call.1} parent=0 // pred_region
    _
  $region9: #{tpu_custom_call.1} parent=0 // pred_fallthru
    _
  // Predicated region
  $region10: #{tpu_custom_call.1} parent=0 // pred_check
    _
  $region11: #{tpu_custom_call.1} parent=0 // pred_check_branch
    %20 = sbr.rel (0) target = $region13
  $region12: #{tpu_custom_call.1} parent=0 // pred_region
    _
  $region13: #{tpu_custom_call.1} parent=0 // pred_fallthru
    _
  // Predicated region
  $region14: #{tpu_custom_call.1} parent=0 // pred_check
    _
  $region15: #{tpu_custom_call.1} parent=0 // pred_check_branch
    %22 = sbr.rel (0) target = $region17
  $region16: #{tpu_custom_call.1} parent=0 // pred_region
    _
  $region17: #{tpu_custom_call.1} parent=0 // pred_fallthru
    _
  // Predicated region
  $region18: #{tpu_custom_call.1} parent=0 // pred_check
    _
  $region19: #{tpu_custom_call.1} parent=0 // pred_check_branch
    %24 = sbr.rel (0) target = $region21
  $region20: #{tpu_custom_call.1} parent=0 // pred_region
    _
  $region21: #{tpu_custom_call.1} parent=0 // pred_fallthru
    _
  // Predicated region
  $region22: #{tpu_custom_call.1} parent=0 // pred_check
    _
  $region23: #{tpu_custom_call.1} parent=0 // pred_check_branch
    %26 = sbr.rel (0) target = $region25
  $region24: #{tpu_custom_call.1} parent=0 // pred_region
    _
  $region25: #{tpu_custom_call.1} parent=0 // pred_fallthru
    _
  // Predicated region
  $region26: #{tpu_custom_call.1} parent=0 // pred_check
    _
  $region27: #{tpu_custom_call.1} parent=0 // pred_check_branch
    %28 = sbr.rel (0) target = $region29
  $region28: #{tpu_custom_call.1} parent=0 // pred_region
    _
  $region29: #{tpu_custom_call.1} parent=0 // pred_fallthru
    _
  // Predicated region
  $region30: #{tpu_custom_call.1} parent=0 // pred_check
    _
  $region31: #{tpu_custom_call.1} parent=0 // pred_check_branch
    %30 = sbr.rel (0) target = $region33
  $region32: #{tpu_custom_call.1} parent=0 // pred_region
    _
  $region33: #{tpu_custom_call.1} parent=0 // pred_fallthru
    _
  %v32 = vld [vmem:[%s0] sm:$0xf]
  %v33 = vld [vmem:[%s0 + $0x4] sm:$0xf]
  %v34 = vld [vmem:[%s0 + $0x8] sm:$0xf]
  %v35 = vld [vmem:[%s0 + $0xc] sm:$0xf]
  %v36 = vld [vmem:[%s0 + $0x10] sm:$0xf]
  %v37 = vld [vmem:[%s0 + $0x14] sm:$0xf]
  %v38 = vld [vmem:[%s0 + $0x18] sm:$0xf]
  %v39 = vld [vmem:[%s0 + $0x1c] sm:$0xf]
  %v40 = vld [vmem:[%s0 + $0x20] sm:$0xf]
  %v41 = vld [vmem:[%s0 + $0x24] sm:$0xf]
  %v42 = vld [vmem:[%s0 + $0x28] sm:$0xf]
  %v43 = vld [vmem:[%s0 + $0x2c] sm:$0xf]
  %v44 = vld [vmem:[%s0 + $0x30] sm:$0xf]
  %v45 = vld [vmem:[%s0 + $0x34] sm:$0xf]
  %v46 = vld [vmem:[%s0 + $0x38] sm:$0xf]
  %v47 = vld [vmem:[%s0 + $0x3c] sm:$0xf]
  %v48 = vld [vmem:[%s0 + $0x40] sm:$0xf]
  %v49 = vld [vmem:[%s0 + $0x44] sm:$0xf]
  %v50 = vld [vmem:[%s0 + $0x48] sm:$0xf]
  %v51 = vld [vmem:[%s0 + $0x4c] sm:$0xf]
  %v52 = vld [vmem:[%s0 + $0x50] sm:$0xf]
  %v53 = vld [vmem:[%s0 + $0x54] sm:$0xf]
  %v54 = vld [vmem:[%s0 + $0x58] sm:$0xf]
  %v55 = vld [vmem:[%s0 + $0x5c] sm:$0xf]
  %v56 = vld [vmem:[%s0 + $0x60] sm:$0xf]
  %v57 = vld [vmem:[%s0 + $0x64] sm:$0xf]
  %v58 = vld [vmem:[%s0 + $0x68] sm:$0xf]
  %v59 = vld [vmem:[%s0 + $0x6c] sm:$0xf]
  %v60 = vld [vmem:[%s0 + $0x70] sm:$0xf]
  %v61 = vld [vmem:[%s0 + $0x74] sm:$0xf]
  %v62 = vld [vmem:[%s0 + $0x78] sm:$0xf]
  %v63 = vld [vmem:[%s0 + $0x7c] sm:$0xf]
  %v64 = vld [vmem:[%s0 + $0x80] sm:$0xf]
  %v65 = vld [vmem:[%s0 + $0x84] sm:$0xf]
  %v66 = vld [vmem:[%s0 + $0x88] sm:$0xf]
  %v67 = vld [vmem:[%s0 + $0x8c] sm:$0xf]
  %v68 = vld [vmem:[%s0 + $0x90] sm:$0xf]
  %v69 = vld [vmem:[%s0 + $0x94] sm:$0xf]
  %v70 = vld [vmem:[%s0 + $0x98] sm:$0xf]
  %v71 = vld [vmem:[%s0 + $0x9c] sm:$0xf]
  %v72 = vld [vmem:[%s0 + $0xa0] sm:$0xf]
  %v73 = vld [vmem:[%s0 + $0xa4] sm:$0xf]
  %v74 = vld [vmem:[%s0 + $0xa8] sm:$0xf]
  %v75 = vld [vmem:[%s0 + $0xac] sm:$0xf]
  %v76 = vld [vmem:[%s0 + $0xb0] sm:$0xf]
  %v77 = vld [vmem:[%s0 + $0xb4] sm:$0xf]
  %v78 = vld [vmem:[%s0 + $0xb8] sm:$0xf]
  %v79 = vld [vmem:[%s0 + $0xbc] sm:$0xf]
  %v80 = vld [vmem:[%s0 + $0xc0] sm:$0xf]
  %v81 = vld [vmem:[%s0 + $0xc4] sm:$0xf]
  %v82 = vld [vmem:[%s0 + $0xc8] sm:$0xf]
  %v83 = vld [vmem:[%s0 + $0xcc] sm:$0xf]
  %v84 = vld [vmem:[%s0 + $0xd0] sm:$0xf]
  %v85 = vld [vmem:[%s0 + $0xd4] sm:$0xf]
  %v86 = vld [vmem:[%s0 + $0xd8] sm:$0xf]
  %v87 = vld [vmem:[%s0 + $0xdc] sm:$0xf]
  %v88 = vld [vmem:[%s0 + $0xe0] sm:$0xf]
  %v89 = vld [vmem:[%s0 + $0xe4] sm:$0xf]
  %v90 = vld [vmem:[%s0 + $0xe8] sm:$0xf]
  %v91 = vld [vmem:[%s0 + $0xec] sm:$0xf]
  %v92 = vld [vmem:[%s0 + $0xf0] sm:$0xf]
  %v93 = vld [vmem:[%s0 + $0xf4] sm:$0xf]
  %v94 = vld [vmem:[%s0 + $0xf8] sm:$0xf]
  %v95 = vld [vmem:[%s0 + $0xfc] sm:$0xf]
  %v96 = vld [vmem:[%s3] sm:$0xf]
  %v97 = vld [vmem:[%s3 + $0x4] sm:$0xf]
  %v98 = vld [vmem:[%s1] sm:$0xf]
  %v99 = vld [vmem:[%s1 + $0x4] sm:$0xf]
  %v100 = vld [vmem:[%s1 + $0x8] sm:$0xf]
  %v101 = vld [vmem:[%s1 + $0xc] sm:$0xf]
  %v102 = vld [vmem:[%s1 + $0x10] sm:$0xf]
  %v103 = vld [vmem:[%s1 + $0x14] sm:$0xf]
  %v104 = vld [vmem:[%s1 + $0x18] sm:$0xf]
  %v105 = vld [vmem:[%s1 + $0x1c] sm:$0xf]
  %v106 = vld [vmem:[%s1 + $0x20] sm:$0xf]
  %v107 = vld [vmem:[%s1 + $0x24] sm:$0xf]
  %v108 = vld [vmem:[%s1 + $0x28] sm:$0xf]
  %v109 = vld [vmem:[%s1 + $0x2c] sm:$0xf]
  %v110 = vld [vmem:[%s1 + $0x30] sm:$0xf]
  %v111 = vld [vmem:[%s1 + $0x34] sm:$0xf]
  %v112 = vld [vmem:[%s1 + $0x38] sm:$0xf]
  %v113 = vld [vmem:[%s1 + $0x3c] sm:$0xf]
  %v114 = vld [vmem:[%s1 + $0x40] sm:$0xf]
  %v115 = vld [vmem:[%s1 + $0x44] sm:$0xf]
  %v116 = vld [vmem:[%s1 + $0x48] sm:$0xf]
  %v117 = vld [vmem:[%s1 + $0x4c] sm:$0xf]
  %v118 = vld [vmem:[%s1 + $0x50] sm:$0xf]
  %v119 = vld [vmem:[%s1 + $0x54] sm:$0xf]
  %v120 = vld [vmem:[%s1 + $0x58] sm:$0xf]
  %v121 = vld [vmem:[%s1 + $0x5c] sm:$0xf]
  %v122 = vld [vmem:[%s1 + $0x60] sm:$0xf]
  %v123 = vld [vmem:[%s1 + $0x64] sm:$0xf]
  %v124 = vld [vmem:[%s1 + $0x68] sm:$0xf]
  %v125 = vld [vmem:[%s1 + $0x6c] sm:$0xf]
  %v126 = vld [vmem:[%s1 + $0x70] sm:$0xf]
  %v127 = vld [vmem:[%s1 + $0x74] sm:$0xf]
  %v128 = vld [vmem:[%s1 + $0x78] sm:$0xf]
  %v129 = vld [vmem:[%s1 + $0x7c] sm:$0xf]
  %v130 = vld [vmem:[%s1 + $0x80] sm:$0xf]
  %v131 = vld [vmem:[%s1 + $0x84] sm:$0xf]
  %v132 = vld [vmem:[%s1 + $0x88] sm:$0xf]
  %v133 = vld [vmem:[%s1 + $0x8c] sm:$0xf]
  %v134 = vld [vmem:[%s1 + $0x90] sm:$0xf]
  %v135 = vld [vmem:[%s1 + $0x94] sm:$0xf]
  %v136 = vld [vmem:[%s1 + $0x98] sm:$0xf]
  %v137 = vld [vmem:[%s1 + $0x9c] sm:$0xf]
  %v138 = vld [vmem:[%s1 + $0xa0] sm:$0xf]
  %v139 = vld [vmem:[%s1 + $0xa4] sm:$0xf]
  %v140 = vld [vmem:[%s1 + $0xa8] sm:$0xf]
  %v141 = vld [vmem:[%s1 + $0xac] sm:$0xf]
  %v142 = vld [vmem:[%s1 + $0xb0] sm:$0xf]
  %v143 = vld [vmem:[%s1 + $0xb4] sm:$0xf]
  %v144 = vld [vmem:[%s1 + $0xb8] sm:$0xf]
  %v145 = vld [vmem:[%s1 + $0xbc] sm:$0xf]
  %v146 = vld [vmem:[%s1 + $0xc0] sm:$0xf]
  %v147 = vld [vmem:[%s1 + $0xc4] sm:$0xf]
  %v148 = vld [vmem:[%s1 + $0xc8] sm:$0xf]
  %v149 = vld [vmem:[%s1 + $0xcc] sm:$0xf]
  %v150 = vld [vmem:[%s1 + $0xd0] sm:$0xf]
  %v151 = vld [vmem:[%s1 + $0xd4] sm:$0xf]
  %v152 = vld [vmem:[%s1 + $0xd8] sm:$0xf]
  %v153 = vld [vmem:[%s1 + $0xdc] sm:$0xf]
  %v154 = vld [vmem:[%s1 + $0xe0] sm:$0xf]
  %v155 = vld [vmem:[%s1 + $0xe4] sm:$0xf]
  %v156 = vld [vmem:[%s1 + $0xe8] sm:$0xf]
  %v157 = vld [vmem:[%s1 + $0xec] sm:$0xf]
  %v158 = vld [vmem:[%s1 + $0xf0] sm:$0xf]
  %v159 = vld [vmem:[%s1 + $0xf4] sm:$0xf]
  %v160 = vld [vmem:[%s1 + $0xf8] sm:$0xf]
  %v161 = vld [vmem:[%s1 + $0xfc] sm:$0xf]
  %v162 = vld [vmem:[%s4] sm:$0xf]
  %v163 = vld [vmem:[%s4 + $0x4] sm:$0xf]
  %v164 = vld [vmem:[%s4 + $0x8] sm:$0xf]
  %v229 = vunpack.c.l.b16 %v98
  %v230 = vunpack.c.l.b16 %v99
  %v231 = vunpack.c.l.b16 %v100
  %v232 = vunpack.c.l.b16 %v101
  %v233 = vunpack.c.l.b16 %v102
  %v234 = vunpack.c.l.b16 %v103
  %v235 = vunpack.c.l.b16 %v104
  %v236 = vunpack.c.l.b16 %v105
  %v237 = vunpack.c.l.b16 %v106
  %v238 = vunpack.c.l.b16 %v107
  %v239 = vunpack.c.l.b16 %v108
  %v240 = vunpack.c.l.b16 %v109
  %v241 = vunpack.c.l.b16 %v110
  %v242 = vunpack.c.l.b16 %v111
  %v243 = vunpack.c.l.b16 %v112
  %v244 = vunpack.c.l.b16 %v113
  %v245 = vunpack.c.l.b16 %v114
  %v246 = vunpack.c.l.b16 %v115
  %v247 = vunpack.c.l.b16 %v116
  %v248 = vunpack.c.l.b16 %v117
  %v249 = vunpack.c.l.b16 %v118
  %v250 = vunpack.c.l.b16 %v119
  %v251 = vunpack.c.l.b16 %v120
  %v252 = vunpack.c.l.b16 %v121
  %v253 = vunpack.c.l.b16 %v122
  %v254 = vunpack.c.l.b16 %v123
  %v255 = vunpack.c.l.b16 %v124
  %v256 = vunpack.c.l.b16 %v125
  %v257 = vunpack.c.l.b16 %v126
  %v258 = vunpack.c.l.b16 %v127
  %v259 = vunpack.c.l.b16 %v128
  %v260 = vunpack.c.l.b16 %v129
  %v261 = vunpack.c.l.b16 %v130
  %v262 = vunpack.c.l.b16 %v131
  %v263 = vunpack.c.l.b16 %v132
  %v264 = vunpack.c.l.b16 %v133
  %v265 = vunpack.c.l.b16 %v134
  %v266 = vunpack.c.l.b16 %v135
  %v267 = vunpack.c.l.b16 %v136
  %v268 = vunpack.c.l.b16 %v137
  %v269 = vunpack.c.l.b16 %v138
  %v270 = vunpack.c.l.b16 %v139
  %v271 = vunpack.c.l.b16 %v140
  %v272 = vunpack.c.l.b16 %v141
  %v273 = vunpack.c.l.b16 %v142
  %v274 = vunpack.c.l.b16 %v143
  %v275 = vunpack.c.l.b16 %v144
  %v276 = vunpack.c.l.b16 %v145
  %v277 = vunpack.c.l.b16 %v146
  %v278 = vunpack.c.l.b16 %v147
  %v279 = vunpack.c.l.b16 %v148
  %v280 = vunpack.c.l.b16 %v149
  %v281 = vunpack.c.l.b16 %v150
  %v282 = vunpack.c.l.b16 %v151
  %v283 = vunpack.c.l.b16 %v152
  %v284 = vunpack.c.l.b16 %v153
  %v285 = vunpack.c.l.b16 %v154
  %v286 = vunpack.c.l.b16 %v155
  %v287 = vunpack.c.l.b16 %v156
  %v288 = vunpack.c.l.b16 %v157
  %v289 = vunpack.c.l.b16 %v158
  %v290 = vunpack.c.l.b16 %v159
  %v291 = vunpack.c.l.b16 %v160
  %v292 = vunpack.c.l.b16 %v161
  %v293 = vpack.c.b16 %v230, %v229
  %v294 = vpack.c.b16 %v232, %v231
  %v295 = vpack.c.b16 %v234, %v233
  %v296 = vpack.c.b16 %v236, %v235
  %v297 = vpack.c.b16 %v238, %v237
  %v298 = vpack.c.b16 %v240, %v239
  %v299 = vpack.c.b16 %v242, %v241
  %v300 = vpack.c.b16 %v244, %v243
  %v301 = vpack.c.b16 %v246, %v245
  %v302 = vpack.c.b16 %v248, %v247
  %v303 = vpack.c.b16 %v250, %v249
  %v304 = vpack.c.b16 %v252, %v251
  %v305 = vpack.c.b16 %v254, %v253
  %v306 = vpack.c.b16 %v256, %v255
  %v307 = vpack.c.b16 %v258, %v257
  %v308 = vpack.c.b16 %v260, %v259
  %v309 = vpack.c.b16 %v262, %v261
  %v310 = vpack.c.b16 %v264, %v263
  %v311 = vpack.c.b16 %v266, %v265
  %v312 = vpack.c.b16 %v268, %v267
  %v313 = vpack.c.b16 %v270, %v269
  %v314 = vpack.c.b16 %v272, %v271
  %v315 = vpack.c.b16 %v274, %v273
  %v316 = vpack.c.b16 %v276, %v275
  %v317 = vpack.c.b16 %v278, %v277
  %v318 = vpack.c.b16 %v280, %v279
  %v319 = vpack.c.b16 %v282, %v281
  %v320 = vpack.c.b16 %v284, %v283
  %v321 = vpack.c.b16 %v286, %v285
  %v322 = vpack.c.b16 %v288, %v287
  %v323 = vpack.c.b16 %v290, %v289
  %v324 = vpack.c.b16 %v292, %v291
  %v328 = vunpack.c.l.b16 %v162
  %v329 = vunpack.c.l.b16 %v163
  %v330 = vunpack.c.l.b16 %v164
  %v331 = vpack.c.b16 %v329, %v328
  %v332 = vpack.c.b16 %v330, %v330
  %vm334 = vcmask 195584
  %v336 = vsel %vm334, %v293, 0
  %v339 = vsel %vm334, %v294, 0
  %v342 = vsel %vm334, %v295, 0
  %v345 = vsel %vm334, %v296, 0
  %v348 = vsel %vm334, %v297, 0
  %v351 = vsel %vm334, %v298, 0
  %v354 = vsel %vm334, %v299, 0
  %v357 = vsel %vm334, %v300, 0
  %v360 = vsel %vm334, %v301, 0
  %v363 = vsel %vm334, %v302, 0
  %v366 = vsel %vm334, %v303, 0
  %v369 = vsel %vm334, %v304, 0
  %v372 = vsel %vm334, %v305, 0
  %v375 = vsel %vm334, %v306, 0
  %v378 = vsel %vm334, %v307, 0
  %v381 = vsel %vm334, %v308, 0
  %v384 = vsel %vm334, %v309, 0
  %v387 = vsel %vm334, %v310, 0
  %v390 = vsel %vm334, %v311, 0
  %v393 = vsel %vm334, %v312, 0
  %v396 = vsel %vm334, %v313, 0
  %v399 = vsel %vm334, %v314, 0
  %v402 = vsel %vm334, %v315, 0
  %v405 = vsel %vm334, %v316, 0
  %v408 = vsel %vm334, %v317, 0
  %v411 = vsel %vm334, %v318, 0
  %v414 = vsel %vm334, %v319, 0
  %v417 = vsel %vm334, %v320, 0
  %v420 = vsel %vm334, %v321, 0
  %v423 = vsel %vm334, %v322, 0
  %v426 = vsel %vm334, %v323, 0
  %v429 = vsel %vm334, %v324, 0
  %vm431 = vcmask 1043456
  %v433 = vsel %vm431, %v332, 0
  %435 = vmatprep.subr.bf16.mxu0 0
  %436 = vmatpush1.bf16.msra.mxu0 0
  %437 = vmatprep.subr.bf16.mxu0 0
  %438 = vmatpush1.bf16.msra.mxu0 0
  %439 = vmatprep.subr.bf16.mxu0 0
  %440 = vmatpush1.bf16.msra.mxu0 0
  %441 = vmatprep.subr.bf16.mxu0 0
  %442 = vmatpush1.bf16.msra.mxu0 0
  %443 = vmatprep.subr.bf16.mxu0 0
  %444 = vmatpush1.bf16.msra.mxu0 0
  %445 = vmatprep.subr.bf16.mxu0 0
  %446 = vmatpush1.bf16.msra.mxu0 0
  %447 = vmatprep.subr.bf16.mxu0 0
  %448 = vmatpush1.bf16.msra.mxu0 %v433
  %449 = vmatprep.subr.bf16.mxu0 0
  %450 = vmatpush1.bf16.msra.mxu0 %v331
  %451 = vmatprep.subr.bf16.mxu0 0
  %452 = vmatpush2.bf16.msra.mxu0 0
  %453 = vmatprep.subr.bf16.mxu0 0
  %454 = vmatpush2.bf16.msra.mxu0 0
  %455 = vmatprep.subr.bf16.mxu0 0
  %456 = vmatpush2.bf16.msra.mxu0 0
  %457 = vmatprep.subr.bf16.mxu0 0
  %458 = vmatpush2.bf16.msra.mxu0 0
  %459 = vmatprep.subr.bf16.mxu0 0
  %460 = vmatpush2.bf16.msra.mxu0 0
  %461 = vmatprep.subr.bf16.mxu0 0
  %462 = vmatpush2.bf16.msra.mxu0 0
  %463 = vmatprep.subr.bf16.mxu0 0
  %464 = vmatpush2.bf16.msra.mxu0 0
  %465 = vmatprep.subr.bf16.mxu0 0
  %466 = vmatpush2.bf16.msra.mxu0 0
  %467 = vmatprep.mubr.bf16.mxu0 0
  %468 = vmatmul.mubr.bf16.gmra.mxu0 %v336
  %v469 = vpop.f32.mrf.mxu0
  %v470 = vadd.f32 0.0, %v469
  %v471 = vpop.f32.mrf.mxu0
  %v472 = vpop.f32.mrf.mxu0
  %v473 = vadd.f32 0.0, %v472
  %v474 = vpop.f32.mrf.mxu0
  %475 = vmatprep.mubr.bf16.mxu0 0
  %476 = vmatmul.mubr.bf16.gmra.mxu0 %v339
  %v477 = vpop.f32.mrf.mxu0
  %v478 = vadd.f32 0.0, %v477
  %v479 = vpop.f32.mrf.mxu0
  %v480 = vpop.f32.mrf.mxu0
  %v481 = vadd.f32 0.0, %v480
  %v482 = vpop.f32.mrf.mxu0
  %483 = vmatprep.mubr.bf16.mxu0 0
  %484 = vmatmul.mubr.bf16.gmra.mxu0 %v342
  %v485 = vpop.f32.mrf.mxu0
  %v486 = vadd.f32 0.0, %v485
  %v487 = vpop.f32.mrf.mxu0
  %v488 = vpop.f32.mrf.mxu0
  %v489 = vadd.f32 0.0, %v488
  %v490 = vpop.f32.mrf.mxu0
  %491 = vmatprep.mubr.bf16.mxu0 0
  %492 = vmatmul.mubr.bf16.gmra.mxu0 %v345
  %v493 = vpop.f32.mrf.mxu0
  %v494 = vadd.f32 0.0, %v493
  %v495 = vpop.f32.mrf.mxu0
  %v496 = vpop.f32.mrf.mxu0
  %v497 = vadd.f32 0.0, %v496
  %v498 = vpop.f32.mrf.mxu0
  %499 = vmatprep.mubr.bf16.mxu0 0
  %500 = vmatmul.mubr.bf16.gmra.mxu0 %v348
  %v501 = vpop.f32.mrf.mxu0
  %v502 = vadd.f32 0.0, %v501
  %v503 = vpop.f32.mrf.mxu0
  %v504 = vpop.f32.mrf.mxu0
  %v505 = vadd.f32 0.0, %v504
  %v506 = vpop.f32.mrf.mxu0
  %507 = vmatprep.mubr.bf16.mxu0 0
  %508 = vmatmul.mubr.bf16.gmra.mxu0 %v351
  %v509 = vpop.f32.mrf.mxu0
  %v510 = vadd.f32 0.0, %v509
  %v511 = vpop.f32.mrf.mxu0
  %v512 = vpop.f32.mrf.mxu0
  %v513 = vadd.f32 0.0, %v512
  %v514 = vpop.f32.mrf.mxu0
  %515 = vmatprep.mubr.bf16.mxu0 0
  %516 = vmatmul.mubr.bf16.gmra.mxu0 %v354
  %v517 = vpop.f32.mrf.mxu0
  %v518 = vadd.f32 0.0, %v517
  %v519 = vpop.f32.mrf.mxu0
  %v520 = vpop.f32.mrf.mxu0
  %v521 = vadd.f32 0.0, %v520
  %v522 = vpop.f32.mrf.mxu0
  %523 = vmatprep.mubr.bf16.mxu0 0
  %524 = vmatmul.mubr.bf16.gmra.mxu0 %v357
  %v525 = vpop.f32.mrf.mxu0
  %v526 = vadd.f32 0.0, %v525
  %v527 = vpop.f32.mrf.mxu0
  %v528 = vpop.f32.mrf.mxu0
  %v529 = vadd.f32 0.0, %v528
  %v530 = vpop.f32.mrf.mxu0
  %531 = vmatprep.mubr.bf16.mxu0 0
  %532 = vmatmul.mubr.bf16.gmra.mxu0 %v360
  %v533 = vpop.f32.mrf.mxu0
  %v534 = vadd.f32 0.0, %v533
  %v535 = vpop.f32.mrf.mxu0
  %v536 = vpop.f32.mrf.mxu0
  %v537 = vadd.f32 0.0, %v536
  %v538 = vpop.f32.mrf.mxu0
  %539 = vmatprep.mubr.bf16.mxu0 0
  %540 = vmatmul.mubr.bf16.gmra.mxu0 %v363
  %v541 = vpop.f32.mrf.mxu0
  %v542 = vadd.f32 0.0, %v541
  %v543 = vpop.f32.mrf.mxu0
  %v544 = vpop.f32.mrf.mxu0
  %v545 = vadd.f32 0.0, %v544
  %v546 = vpop.f32.mrf.mxu0
  %547 = vmatprep.mubr.bf16.mxu0 0
  %548 = vmatmul.mubr.bf16.gmra.mxu0 %v366
  %v549 = vpop.f32.mrf.mxu0
  %v550 = vadd.f32 0.0, %v549
  %v551 = vpop.f32.mrf.mxu0
  %v552 = vpop.f32.mrf.mxu0
  %v553 = vadd.f32 0.0, %v552
  %v554 = vpop.f32.mrf.mxu0
  %555 = vmatprep.mubr.bf16.mxu0 0
  %556 = vmatmul.mubr.bf16.gmra.mxu0 %v369
  %v557 = vpop.f32.mrf.mxu0
  %v558 = vadd.f32 0.0, %v557
  %v559 = vpop.f32.mrf.mxu0
  %v560 = vpop.f32.mrf.mxu0
  %v561 = vadd.f32 0.0, %v560
  %v562 = vpop.f32.mrf.mxu0
  %563 = vmatprep.mubr.bf16.mxu0 0
  %564 = vmatmul.mubr.bf16.gmra.mxu0 %v372
  %v565 = vpop.f32.mrf.mxu0
  %v566 = vadd.f32 0.0, %v565
  %v567 = vpop.f32.mrf.mxu0
  %v568 = vpop.f32.mrf.mxu0
  %v569 = vadd.f32 0.0, %v568
  %v570 = vpop.f32.mrf.mxu0
  %571 = vmatprep.mubr.bf16.mxu0 0
  %572 = vmatmul.mubr.bf16.gmra.mxu0 %v375
  %v573 = vpop.f32.mrf.mxu0
  %v574 = vadd.f32 0.0, %v573
  %v575 = vpop.f32.mrf.mxu0
  %v576 = vpop.f32.mrf.mxu0
  %v577 = vadd.f32 0.0, %v576
  %v578 = vpop.f32.mrf.mxu0
  %579 = vmatprep.mubr.bf16.mxu0 0
  %580 = vmatmul.mubr.bf16.gmra.mxu0 %v378
  %v581 = vpop.f32.mrf.mxu0
  %v582 = vadd.f32 0.0, %v581
  %v583 = vpop.f32.mrf.mxu0
  %v584 = vpop.f32.mrf.mxu0
  %v585 = vadd.f32 0.0, %v584
  %v586 = vpop.f32.mrf.mxu0
  %587 = vmatprep.mubr.bf16.mxu0 0
  %588 = vmatmul.mubr.bf16.gmra.mxu0 %v381
  %v589 = vpop.f32.mrf.mxu0
  %v590 = vadd.f32 0.0, %v589
  %v591 = vpop.f32.mrf.mxu0
  %v592 = vpop.f32.mrf.mxu0
  %v593 = vadd.f32 0.0, %v592
  %v594 = vpop.f32.mrf.mxu0
  %595 = vmatprep.mubr.bf16.mxu0 0
  %596 = vmatmul.mubr.bf16.gmra.mxu0 %v384
  %v597 = vpop.f32.mrf.mxu0
  %v598 = vadd.f32 0.0, %v597
  %v599 = vpop.f32.mrf.mxu0
  %v600 = vpop.f32.mrf.mxu0
  %v601 = vadd.f32 0.0, %v600
  %v602 = vpop.f32.mrf.mxu0
  %603 = vmatprep.mubr.bf16.mxu0 0
  %604 = vmatmul.mubr.bf16.gmra.mxu0 %v387
  %v605 = vpop.f32.mrf.mxu0
  %v606 = vadd.f32 0.0, %v605
  %v607 = vpop.f32.mrf.mxu0
  %v608 = vpop.f32.mrf.mxu0
  %v609 = vadd.f32 0.0, %v608
  %v610 = vpop.f32.mrf.mxu0
  %611 = vmatprep.mubr.bf16.mxu0 0
  %612 = vmatmul.mubr.bf16.gmra.mxu0 %v390
  %v613 = vpop.f32.mrf.mxu0
  %v614 = vadd.f32 0.0, %v613
  %v615 = vpop.f32.mrf.mxu0
  %v616 = vpop.f32.mrf.mxu0
  %v617 = vadd.f32 0.0, %v616
  %v618 = vpop.f32.mrf.mxu0
  %619 = vmatprep.mubr.bf16.mxu0 0
  %620 = vmatmul.mubr.bf16.gmra.mxu0 %v393
  %v621 = vpop.f32.mrf.mxu0
  %v622 = vadd.f32 0.0, %v621
  %v623 = vpop.f32.mrf.mxu0
  %v624 = vpop.f32.mrf.mxu0
  %v625 = vadd.f32 0.0, %v624
  %v626 = vpop.f32.mrf.mxu0
  %627 = vmatprep.mubr.bf16.mxu0 0
  %628 = vmatmul.mubr.bf16.gmra.mxu0 %v396
  %v629 = vpop.f32.mrf.mxu0
  %v630 = vadd.f32 0.0, %v629
  %v631 = vpop.f32.mrf.mxu0
  %v632 = vpop.f32.mrf.mxu0
  %v633 = vadd.f32 0.0, %v632
  %v634 = vpop.f32.mrf.mxu0
  %635 = vmatprep.mubr.bf16.mxu0 0
  %636 = vmatmul.mubr.bf16.gmra.mxu0 %v399
  %v637 = vpop.f32.mrf.mxu0
  %v638 = vadd.f32 0.0, %v637
  %v639 = vpop.f32.mrf.mxu0
  %v640 = vpop.f32.mrf.mxu0
  %v641 = vadd.f32 0.0, %v640
  %v642 = vpop.f32.mrf.mxu0
  %643 = vmatprep.mubr.bf16.mxu0 0
  %644 = vmatmul.mubr.bf16.gmra.mxu0 %v402
  %v645 = vpop.f32.mrf.mxu0
  %v646 = vadd.f32 0.0, %v645
  %v647 = vpop.f32.mrf.mxu0
  %v648 = vpop.f32.mrf.mxu0
  %v649 = vadd.f32 0.0, %v648
  %v650 = vpop.f32.mrf.mxu0
  %651 = vmatprep.mubr.bf16.mxu0 0
  %652 = vmatmul.mubr.bf16.gmra.mxu0 %v405
  %v653 = vpop.f32.mrf.mxu0
  %v654 = vadd.f32 0.0, %v653
  %v655 = vpop.f32.mrf.mxu0
  %v656 = vpop.f32.mrf.mxu0
  %v657 = vadd.f32 0.0, %v656
  %v658 = vpop.f32.mrf.mxu0
  %659 = vmatprep.mubr.bf16.mxu0 0
  %660 = vmatmul.mubr.bf16.gmra.mxu0 %v408
  %v661 = vpop.f32.mrf.mxu0
  %v662 = vadd.f32 0.0, %v661
  %v663 = vpop.f32.mrf.mxu0
  %v664 = vpop.f32.mrf.mxu0
  %v665 = vadd.f32 0.0, %v664
  %v666 = vpop.f32.mrf.mxu0
  %667 = vmatprep.mubr.bf16.mxu0 0
  %668 = vmatmul.mubr.bf16.gmra.mxu0 %v411
  %v669 = vpop.f32.mrf.mxu0
  %v670 = vadd.f32 0.0, %v669
  %v671 = vpop.f32.mrf.mxu0
  %v672 = vpop.f32.mrf.mxu0
  %v673 = vadd.f32 0.0, %v672
  %v674 = vpop.f32.mrf.mxu0
  %675 = vmatprep.mubr.bf16.mxu0 0
  %676 = vmatmul.mubr.bf16.gmra.mxu0 %v414
  %v677 = vpop.f32.mrf.mxu0
  %v678 = vadd.f32 0.0, %v677
  %v679 = vpop.f32.mrf.mxu0
  %v680 = vpop.f32.mrf.mxu0
  %v681 = vadd.f32 0.0, %v680
  %v682 = vpop.f32.mrf.mxu0
  %683 = vmatprep.mubr.bf16.mxu0 0
  %684 = vmatmul.mubr.bf16.gmra.mxu0 %v417
  %v685 = vpop.f32.mrf.mxu0
  %v686 = vadd.f32 0.0, %v685
  %v687 = vpop.f32.mrf.mxu0
  %v688 = vpop.f32.mrf.mxu0
  %v689 = vadd.f32 0.0, %v688
  %v690 = vpop.f32.mrf.mxu0
  %691 = vmatprep.mubr.bf16.mxu0 0
  %692 = vmatmul.mubr.bf16.gmra.mxu0 %v420
  %v693 = vpop.f32.mrf.mxu0
  %v694 = vadd.f32 0.0, %v693
  %v695 = vpop.f32.mrf.mxu0
  %v696 = vpop.f32.mrf.mxu0
  %v697 = vadd.f32 0.0, %v696
  %v698 = vpop.f32.mrf.mxu0
  %699 = vmatprep.mubr.bf16.mxu0 0
  %700 = vmatmul.mubr.bf16.gmra.mxu0 %v423
  %v701 = vpop.f32.mrf.mxu0
  %v702 = vadd.f32 0.0, %v701
  %v703 = vpop.f32.mrf.mxu0
  %v704 = vpop.f32.mrf.mxu0
  %v705 = vadd.f32 0.0, %v704
  %v706 = vpop.f32.mrf.mxu0
  %707 = vmatprep.mubr.bf16.mxu0 0
  %708 = vmatmul.mubr.bf16.gmra.mxu0 %v426
  %v709 = vpop.f32.mrf.mxu0
  %v710 = vadd.f32 0.0, %v709
  %v711 = vpop.f32.mrf.mxu0
  %v712 = vpop.f32.mrf.mxu0
  %v713 = vadd.f32 0.0, %v712
  %v714 = vpop.f32.mrf.mxu0
  %715 = vmatprep.mubr.bf16.mxu0 0
  %716 = vmatmul.mubr.bf16.gmra.mxu0 %v429
  %v717 = vpop.f32.mrf.mxu0
  %v718 = vadd.f32 0.0, %v717
  %v719 = vpop.f32.mrf.mxu0
  %v720 = vpop.f32.mrf.mxu0
  %v721 = vadd.f32 0.0, %v720
  %v722 = vpop.f32.mrf.mxu0
  %723 = vdwg.mxu0
  %v788 = vunpack.c.l.b16 %v32
  %v789 = vunpack.c.l.b16 %v33
  %v790 = vunpack.c.l.b16 %v34
  %v791 = vunpack.c.l.b16 %v35
  %v792 = vunpack.c.l.b16 %v36
  %v793 = vunpack.c.l.b16 %v37
  %v794 = vunpack.c.l.b16 %v38
  %v795 = vunpack.c.l.b16 %v39
  %v796 = vunpack.c.l.b16 %v40
  %v797 = vunpack.c.l.b16 %v41
  %v798 = vunpack.c.l.b16 %v42
  %v799 = vunpack.c.l.b16 %v43
  %v800 = vunpack.c.l.b16 %v44
  %v801 = vunpack.c.l.b16 %v45
  %v802 = vunpack.c.l.b16 %v46
  %v803 = vunpack.c.l.b16 %v47
  %v804 = vunpack.c.l.b16 %v48
  %v805 = vunpack.c.l.b16 %v49
  %v806 = vunpack.c.l.b16 %v50
  %v807 = vunpack.c.l.b16 %v51
  %v808 = vunpack.c.l.b16 %v52
  %v809 = vunpack.c.l.b16 %v53
  %v810 = vunpack.c.l.b16 %v54
  %v811 = vunpack.c.l.b16 %v55
  %v812 = vunpack.c.l.b16 %v56
  %v813 = vunpack.c.l.b16 %v57
  %v814 = vunpack.c.l.b16 %v58
  %v815 = vunpack.c.l.b16 %v59
  %v816 = vunpack.c.l.b16 %v60
  %v817 = vunpack.c.l.b16 %v61
  %v818 = vunpack.c.l.b16 %v62
  %v819 = vunpack.c.l.b16 %v63
  %v820 = vunpack.c.l.b16 %v64
  %v821 = vunpack.c.l.b16 %v65
  %v822 = vunpack.c.l.b16 %v66
  %v823 = vunpack.c.l.b16 %v67
  %v824 = vunpack.c.l.b16 %v68
  %v825 = vunpack.c.l.b16 %v69
  %v826 = vunpack.c.l.b16 %v70
  %v827 = vunpack.c.l.b16 %v71
  %v828 = vunpack.c.l.b16 %v72
  %v829 = vunpack.c.l.b16 %v73
  %v830 = vunpack.c.l.b16 %v74
  %v831 = vunpack.c.l.b16 %v75
  %v832 = vunpack.c.l.b16 %v76
  %v833 = vunpack.c.l.b16 %v77
  %v834 = vunpack.c.l.b16 %v78
  %v835 = vunpack.c.l.b16 %v79
  %v836 = vunpack.c.l.b16 %v80
  %v837 = vunpack.c.l.b16 %v81
  %v838 = vunpack.c.l.b16 %v82
  %v839 = vunpack.c.l.b16 %v83
  %v840 = vunpack.c.l.b16 %v84
  %v841 = vunpack.c.l.b16 %v85
  %v842 = vunpack.c.l.b16 %v86
  %v843 = vunpack.c.l.b16 %v87
  %v844 = vunpack.c.l.b16 %v88
  %v845 = vunpack.c.l.b16 %v89
  %v846 = vunpack.c.l.b16 %v90
  %v847 = vunpack.c.l.b16 %v91
  %v848 = vunpack.c.l.b16 %v92
  %v849 = vunpack.c.l.b16 %v93
  %v850 = vunpack.c.l.b16 %v94
  %v851 = vunpack.c.l.b16 %v95
  %v852 = vpack.c.b16 %v789, %v788
  %v853 = vpack.c.b16 %v791, %v790
  %v854 = vpack.c.b16 %v793, %v792
  %v855 = vpack.c.b16 %v795, %v794
  %v856 = vpack.c.b16 %v797, %v796
  %v857 = vpack.c.b16 %v799, %v798
  %v858 = vpack.c.b16 %v801, %v800
  %v859 = vpack.c.b16 %v803, %v802
  %v860 = vpack.c.b16 %v805, %v804
  %v861 = vpack.c.b16 %v807, %v806
  %v862 = vpack.c.b16 %v809, %v808
  %v863 = vpack.c.b16 %v811, %v810
  %v864 = vpack.c.b16 %v813, %v812
  %v865 = vpack.c.b16 %v815, %v814
  %v866 = vpack.c.b16 %v817, %v816
  %v867 = vpack.c.b16 %v819, %v818
  %v868 = vpack.c.b16 %v821, %v820
  %v869 = vpack.c.b16 %v823, %v822
  %v870 = vpack.c.b16 %v825, %v824
  %v871 = vpack.c.b16 %v827, %v826
  %v872 = vpack.c.b16 %v829, %v828
  %v873 = vpack.c.b16 %v831, %v830
  %v874 = vpack.c.b16 %v833, %v832
  %v875 = vpack.c.b16 %v835, %v834
  %v876 = vpack.c.b16 %v837, %v836
  %v877 = vpack.c.b16 %v839, %v838
  %v878 = vpack.c.b16 %v841, %v840
  %v879 = vpack.c.b16 %v843, %v842
  %v880 = vpack.c.b16 %v845, %v844
  %v881 = vpack.c.b16 %v847, %v846
  %v882 = vpack.c.b16 %v849, %v848
  %v883 = vpack.c.b16 %v851, %v850
  %v886 = vunpack.c.l.b16 %v96
  %v887 = vunpack.c.l.b16 %v97
  %v888 = vpack.c.b16 %v887, %v886
  %vm890 = vcmask 130048
  %v892 = vsel %vm890, %v852, 0
  %v895 = vsel %vm890, %v853, 0
  %v898 = vsel %vm890, %v854, 0
  %v901 = vsel %vm890, %v855, 0
  %v904 = vsel %vm890, %v856, 0
  %v907 = vsel %vm890, %v857, 0
  %v910 = vsel %vm890, %v858, 0
  %v913 = vsel %vm890, %v859, 0
  %v916 = vsel %vm890, %v860, 0
  %v919 = vsel %vm890, %v861, 0
  %v922 = vsel %vm890, %v862, 0
  %v925 = vsel %vm890, %v863, 0
  %v928 = vsel %vm890, %v864, 0
  %v931 = vsel %vm890, %v865, 0
  %v934 = vsel %vm890, %v866, 0
  %v937 = vsel %vm890, %v867, 0
  %v940 = vsel %vm890, %v868, 0
  %v943 = vsel %vm890, %v869, 0
  %v946 = vsel %vm890, %v870, 0
  %v949 = vsel %vm890, %v871, 0
  %v952 = vsel %vm890, %v872, 0
  %v955 = vsel %vm890, %v873, 0
  %v958 = vsel %vm890, %v874, 0
  %v961 = vsel %vm890, %v875, 0
  %v964 = vsel %vm890, %v876, 0
  %v967 = vsel %vm890, %v877, 0
  %v970 = vsel %vm890, %v878, 0
  %v973 = vsel %vm890, %v879, 0
  %v976 = vsel %vm890, %v880, 0
  %v979 = vsel %vm890, %v881, 0
  %v982 = vsel %vm890, %v882, 0
  %v985 = vsel %vm890, %v883, 0
  %987 = vmatprep.subr.bf16.mxu0 0
  %988 = vmatpush1.bf16.msra.mxu0 0
  %989 = vmatprep.subr.bf16.mxu0 0
  %990 = vmatpush1.bf16.msra.mxu0 0
  %991 = vmatprep.subr.bf16.mxu0 0
  %992 = vmatpush1.bf16.msra.mxu0 0
  %993 = vmatprep.subr.bf16.mxu0 0
  %994 = vmatpush1.bf16.msra.mxu0 0
  %995 = vmatprep.subr.bf16.mxu0 0
  %996 = vmatpush1.bf16.msra.mxu0 0
  %997 = vmatprep.subr.bf16.mxu0 0
  %998 = vmatpush1.bf16.msra.mxu0 0
  %999 = vmatprep.subr.bf16.mxu0 0
  %1000 = vmatpush1.bf16.msra.mxu0 0
  %1001 = vmatprep.subr.bf16.mxu0 0
  %1002 = vmatpush1.bf16.msra.mxu0 %v888
  %1003 = vmatprep.subr.bf16.mxu0 0
  %1004 = vmatpush2.bf16.msra.mxu0 0
  %1005 = vmatprep.subr.bf16.mxu0 0
  %1006 = vmatpush2.bf16.msra.mxu0 0
  %1007 = vmatprep.subr.bf16.mxu0 0
  %1008 = vmatpush2.bf16.msra.mxu0 0
  %1009 = vmatprep.subr.bf16.mxu0 0
  %1010 = vmatpush2.bf16.msra.mxu0 0
  %1011 = vmatprep.subr.bf16.mxu0 0
  %1012 = vmatpush2.bf16.msra.mxu0 0
  %1013 = vmatprep.subr.bf16.mxu0 0
  %1014 = vmatpush2.bf16.msra.mxu0 0
  %1015 = vmatprep.subr.bf16.mxu0 0
  %1016 = vmatpush2.bf16.msra.mxu0 0
  %1017 = vmatprep.subr.bf16.mxu0 0
  %1018 = vmatpush2.bf16.msra.mxu0 0
  %1019 = vmatprep.mubr.bf16.mxu0 0
  %1020 = vmatmul.mubr.bf16.gmra.mxu0 %v892
  %v1021 = vpop.f32.mrf.mxu0
  %v1022 = vadd.f32 %v470, %v1021
  %v1023 = vpop.f32.mrf.mxu0
  %v1024 = vpop.f32.mrf.mxu0
  %v1025 = vadd.f32 %v473, %v1024
  %v1026 = vpop.f32.mrf.mxu0
  %1027 = vmatprep.mubr.bf16.mxu0 0
  %1028 = vmatmul.mubr.bf16.gmra.mxu0 %v895
  %v1029 = vpop.f32.mrf.mxu0
  %v1030 = vadd.f32 %v478, %v1029
  %v1031 = vpop.f32.mrf.mxu0
  %v1032 = vpop.f32.mrf.mxu0
  %v1033 = vadd.f32 %v481, %v1032
  %v1034 = vpop.f32.mrf.mxu0
  %1035 = vmatprep.mubr.bf16.mxu0 0
  %1036 = vmatmul.mubr.bf16.gmra.mxu0 %v898
  %v1037 = vpop.f32.mrf.mxu0
  %v1038 = vadd.f32 %v486, %v1037
  %v1039 = vpop.f32.mrf.mxu0
  %v1040 = vpop.f32.mrf.mxu0
  %v1041 = vadd.f32 %v489, %v1040
  %v1042 = vpop.f32.mrf.mxu0
  %1043 = vmatprep.mubr.bf16.mxu0 0
  %1044 = vmatmul.mubr.bf16.gmra.mxu0 %v901
  %v1045 = vpop.f32.mrf.mxu0
  %v1046 = vadd.f32 %v494, %v1045
  %v1047 = vpop.f32.mrf.mxu0
  %v1048 = vpop.f32.mrf.mxu0
  %v1049 = vadd.f32 %v497, %v1048
  %v1050 = vpop.f32.mrf.mxu0
  %1051 = vmatprep.mubr.bf16.mxu0 0
  %1052 = vmatmul.mubr.bf16.gmra.mxu0 %v904
  %v1053 = vpop.f32.mrf.mxu0
  %v1054 = vadd.f32 %v502, %v1053
  %v1055 = vpop.f32.mrf.mxu0
  %v1056 = vpop.f32.mrf.mxu0
  %v1057 = vadd.f32 %v505, %v1056
  %v1058 = vpop.f32.mrf.mxu0
  %1059 = vmatprep.mubr.bf16.mxu0 0
  %1060 = vmatmul.mubr.bf16.gmra.mxu0 %v907
  %v1061 = vpop.f32.mrf.mxu0
  %v1062 = vadd.f32 %v510, %v1061
  %v1063 = vpop.f32.mrf.mxu0
  %v1064 = vpop.f32.mrf.mxu0
  %v1065 = vadd.f32 %v513, %v1064
  %v1066 = vpop.f32.mrf.mxu0
  %1067 = vmatprep.mubr.bf16.mxu0 0
  %1068 = vmatmul.mubr.bf16.gmra.mxu0 %v910
  %v1069 = vpop.f32.mrf.mxu0
  %v1070 = vadd.f32 %v518, %v1069
  %v1071 = vpop.f32.mrf.mxu0
  %v1072 = vpop.f32.mrf.mxu0
  %v1073 = vadd.f32 %v521, %v1072
  %v1074 = vpop.f32.mrf.mxu0
  %1075 = vmatprep.mubr.bf16.mxu0 0
  %1076 = vmatmul.mubr.bf16.gmra.mxu0 %v913
  %v1077 = vpop.f32.mrf.mxu0
  %v1078 = vadd.f32 %v526, %v1077
  %v1079 = vpop.f32.mrf.mxu0
  %v1080 = vpop.f32.mrf.mxu0
  %v1081 = vadd.f32 %v529, %v1080
  %v1082 = vpop.f32.mrf.mxu0
  %1083 = vmatprep.mubr.bf16.mxu0 0
  %1084 = vmatmul.mubr.bf16.gmra.mxu0 %v916
  %v1085 = vpop.f32.mrf.mxu0
  %v1086 = vadd.f32 %v534, %v1085
  %v1087 = vpop.f32.mrf.mxu0
  %v1088 = vpop.f32.mrf.mxu0
  %v1089 = vadd.f32 %v537, %v1088
  %v1090 = vpop.f32.mrf.mxu0
  %1091 = vmatprep.mubr.bf16.mxu0 0
  %1092 = vmatmul.mubr.bf16.gmra.mxu0 %v919
  %v1093 = vpop.f32.mrf.mxu0
  %v1094 = vadd.f32 %v542, %v1093
  %v1095 = vpop.f32.mrf.mxu0
  %v1096 = vpop.f32.mrf.mxu0
  %v1097 = vadd.f32 %v545, %v1096
  %v1098 = vpop.f32.mrf.mxu0
  %1099 = vmatprep.mubr.bf16.mxu0 0
  %1100 = vmatmul.mubr.bf16.gmra.mxu0 %v922
  %v1101 = vpop.f32.mrf.mxu0
  %v1102 = vadd.f32 %v550, %v1101
  %v1103 = vpop.f32.mrf.mxu0
  %v1104 = vpop.f32.mrf.mxu0
  %v1105 = vadd.f32 %v553, %v1104
  %v1106 = vpop.f32.mrf.mxu0
  %1107 = vmatprep.mubr.bf16.mxu0 0
  %1108 = vmatmul.mubr.bf16.gmra.mxu0 %v925
  %v1109 = vpop.f32.mrf.mxu0
  %v1110 = vadd.f32 %v558, %v1109
  %v1111 = vpop.f32.mrf.mxu0
  %v1112 = vpop.f32.mrf.mxu0
  %v1113 = vadd.f32 %v561, %v1112
  %v1114 = vpop.f32.mrf.mxu0
  %1115 = vmatprep.mubr.bf16.mxu0 0
  %1116 = vmatmul.mubr.bf16.gmra.mxu0 %v928
  %v1117 = vpop.f32.mrf.mxu0
  %v1118 = vadd.f32 %v566, %v1117
  %v1119 = vpop.f32.mrf.mxu0
  %v1120 = vpop.f32.mrf.mxu0
  %v1121 = vadd.f32 %v569, %v1120
  %v1122 = vpop.f32.mrf.mxu0
  %1123 = vmatprep.mubr.bf16.mxu0 0
  %1124 = vmatmul.mubr.bf16.gmra.mxu0 %v931
  %v1125 = vpop.f32.mrf.mxu0
  %v1126 = vadd.f32 %v574, %v1125
  %v1127 = vpop.f32.mrf.mxu0
  %v1128 = vpop.f32.mrf.mxu0
  %v1129 = vadd.f32 %v577, %v1128
  %v1130 = vpop.f32.mrf.mxu0
  %1131 = vmatprep.mubr.bf16.mxu0 0
  %1132 = vmatmul.mubr.bf16.gmra.mxu0 %v934
  %v1133 = vpop.f32.mrf.mxu0
  %v1134 = vadd.f32 %v582, %v1133
  %v1135 = vpop.f32.mrf.mxu0
  %v1136 = vpop.f32.mrf.mxu0
  %v1137 = vadd.f32 %v585, %v1136
  %v1138 = vpop.f32.mrf.mxu0
  %1139 = vmatprep.mubr.bf16.mxu0 0
  %1140 = vmatmul.mubr.bf16.gmra.mxu0 %v937
  %v1141 = vpop.f32.mrf.mxu0
  %v1142 = vadd.f32 %v590, %v1141
  %v1143 = vpop.f32.mrf.mxu0
  %v1144 = vpop.f32.mrf.mxu0
  %v1145 = vadd.f32 %v593, %v1144
  %v1146 = vpop.f32.mrf.mxu0
  %1147 = vmatprep.mubr.bf16.mxu0 0
  %1148 = vmatmul.mubr.bf16.gmra.mxu0 %v940
  %v1149 = vpop.f32.mrf.mxu0
  %v1150 = vadd.f32 %v598, %v1149
  %v1151 = vpop.f32.mrf.mxu0
  %v1152 = vpop.f32.mrf.mxu0
  %v1153 = vadd.f32 %v601, %v1152
  %v1154 = vpop.f32.mrf.mxu0
  %1155 = vmatprep.mubr.bf16.mxu0 0
  %1156 = vmatmul.mubr.bf16.gmra.mxu0 %v943
  %v1157 = vpop.f32.mrf.mxu0
  %v1158 = vadd.f32 %v606, %v1157
  %v1159 = vpop.f32.mrf.mxu0
  %v1160 = vpop.f32.mrf.mxu0
  %v1161 = vadd.f32 %v609, %v1160
  %v1162 = vpop.f32.mrf.mxu0
  %1163 = vmatprep.mubr.bf16.mxu0 0
  %1164 = vmatmul.mubr.bf16.gmra.mxu0 %v946
  %v1165 = vpop.f32.mrf.mxu0
  %v1166 = vadd.f32 %v614, %v1165
  %v1167 = vpop.f32.mrf.mxu0
  %v1168 = vpop.f32.mrf.mxu0
  %v1169 = vadd.f32 %v617, %v1168
  %v1170 = vpop.f32.mrf.mxu0
  %1171 = vmatprep.mubr.bf16.mxu0 0
  %1172 = vmatmul.mubr.bf16.gmra.mxu0 %v949
  %v1173 = vpop.f32.mrf.mxu0
  %v1174 = vadd.f32 %v622, %v1173
  %v1175 = vpop.f32.mrf.mxu0
  %v1176 = vpop.f32.mrf.mxu0
  %v1177 = vadd.f32 %v625, %v1176
  %v1178 = vpop.f32.mrf.mxu0
  %1179 = vmatprep.mubr.bf16.mxu0 0
  %1180 = vmatmul.mubr.bf16.gmra.mxu0 %v952
  %v1181 = vpop.f32.mrf.mxu0
  %v1182 = vadd.f32 %v630, %v1181
  %v1183 = vpop.f32.mrf.mxu0
  %v1184 = vpop.f32.mrf.mxu0
  %v1185 = vadd.f32 %v633, %v1184
  %v1186 = vpop.f32.mrf.mxu0
  %1187 = vmatprep.mubr.bf16.mxu0 0
  %1188 = vmatmul.mubr.bf16.gmra.mxu0 %v955
  %v1189 = vpop.f32.mrf.mxu0
  %v1190 = vadd.f32 %v638, %v1189
  %v1191 = vpop.f32.mrf.mxu0
  %v1192 = vpop.f32.mrf.mxu0
  %v1193 = vadd.f32 %v641, %v1192
  %v1194 = vpop.f32.mrf.mxu0
  %1195 = vmatprep.mubr.bf16.mxu0 0
  %1196 = vmatmul.mubr.bf16.gmra.mxu0 %v958
  %v1197 = vpop.f32.mrf.mxu0
  %v1198 = vadd.f32 %v646, %v1197
  %v1199 = vpop.f32.mrf.mxu0
  %v1200 = vpop.f32.mrf.mxu0
  %v1201 = vadd.f32 %v649, %v1200
  %v1202 = vpop.f32.mrf.mxu0
  %1203 = vmatprep.mubr.bf16.mxu0 0
  %1204 = vmatmul.mubr.bf16.gmra.mxu0 %v961
  %v1205 = vpop.f32.mrf.mxu0
  %v1206 = vadd.f32 %v654, %v1205
  %v1207 = vpop.f32.mrf.mxu0
  %v1208 = vpop.f32.mrf.mxu0
  %v1209 = vadd.f32 %v657, %v1208
  %v1210 = vpop.f32.mrf.mxu0
  %1211 = vmatprep.mubr.bf16.mxu0 0
  %1212 = vmatmul.mubr.bf16.gmra.mxu0 %v964
  %v1213 = vpop.f32.mrf.mxu0
  %v1214 = vadd.f32 %v662, %v1213
  %v1215 = vpop.f32.mrf.mxu0
  %v1216 = vpop.f32.mrf.mxu0
  %v1217 = vadd.f32 %v665, %v1216
  %v1218 = vpop.f32.mrf.mxu0
  %1219 = vmatprep.mubr.bf16.mxu0 0
  %1220 = vmatmul.mubr.bf16.gmra.mxu0 %v967
  %v1221 = vpop.f32.mrf.mxu0
  %v1222 = vadd.f32 %v670, %v1221
  %v1223 = vpop.f32.mrf.mxu0
  %v1224 = vpop.f32.mrf.mxu0
  %v1225 = vadd.f32 %v673, %v1224
  %v1226 = vpop.f32.mrf.mxu0
  %1227 = vmatprep.mubr.bf16.mxu0 0
  %1228 = vmatmul.mubr.bf16.gmra.mxu0 %v970
  %v1229 = vpop.f32.mrf.mxu0
  %v1230 = vadd.f32 %v678, %v1229
  %v1231 = vpop.f32.mrf.mxu0
  %v1232 = vpop.f32.mrf.mxu0
  %v1233 = vadd.f32 %v681, %v1232
  %v1234 = vpop.f32.mrf.mxu0
  %1235 = vmatprep.mubr.bf16.mxu0 0
  %1236 = vmatmul.mubr.bf16.gmra.mxu0 %v973
  %v1237 = vpop.f32.mrf.mxu0
  %v1238 = vadd.f32 %v686, %v1237
  %v1239 = vpop.f32.mrf.mxu0
  %v1240 = vpop.f32.mrf.mxu0
  %v1241 = vadd.f32 %v689, %v1240
  %v1242 = vpop.f32.mrf.mxu0
  %1243 = vmatprep.mubr.bf16.mxu0 0
  %1244 = vmatmul.mubr.bf16.gmra.mxu0 %v976
  %v1245 = vpop.f32.mrf.mxu0
  %v1246 = vadd.f32 %v694, %v1245
  %v1247 = vpop.f32.mrf.mxu0
  %v1248 = vpop.f32.mrf.mxu0
  %v1249 = vadd.f32 %v697, %v1248
  %v1250 = vpop.f32.mrf.mxu0
  %1251 = vmatprep.mubr.bf16.mxu0 0
  %1252 = vmatmul.mubr.bf16.gmra.mxu0 %v979
  %v1253 = vpop.f32.mrf.mxu0
  %v1254 = vadd.f32 %v702, %v1253
  %v1255 = vpop.f32.mrf.mxu0
  %v1256 = vpop.f32.mrf.mxu0
  %v1257 = vadd.f32 %v705, %v1256
  %v1258 = vpop.f32.mrf.mxu0
  %1259 = vmatprep.mubr.bf16.mxu0 0
  %1260 = vmatmul.mubr.bf16.gmra.mxu0 %v982
  %v1261 = vpop.f32.mrf.mxu0
  %v1262 = vadd.f32 %v710, %v1261
  %v1263 = vpop.f32.mrf.mxu0
  %v1264 = vpop.f32.mrf.mxu0
  %v1265 = vadd.f32 %v713, %v1264
  %v1266 = vpop.f32.mrf.mxu0
  %1267 = vmatprep.mubr.bf16.mxu0 0
  %1268 = vmatmul.mubr.bf16.gmra.mxu0 %v985
  %v1269 = vpop.f32.mrf.mxu0
  %v1270 = vadd.f32 %v718, %v1269
  %v1271 = vpop.f32.mrf.mxu0
  %v1272 = vpop.f32.mrf.mxu0
  %v1273 = vadd.f32 %v721, %v1272
  %v1274 = vpop.f32.mrf.mxu0
  %1275 = vdwg.mxu0
  %v1276 = vld [vmem:[%s2] sm:$0xf]
  %v1277 = vld [vmem:[%s2 + $0x4] sm:$0xf]
  %v1278 = vld [vmem:[%s2 + $0x8] sm:$0xf]
  %v1279 = vld [vmem:[%s2 + $0xc] sm:$0xf]
  %v1280 = vld [vmem:[%s2 + $0x10] sm:$0xf]
  %v1281 = vld [vmem:[%s2 + $0x14] sm:$0xf]
  %v1282 = vld [vmem:[%s2 + $0x18] sm:$0xf]
  %v1283 = vld [vmem:[%s2 + $0x1c] sm:$0xf]
  %v1284 = vld [vmem:[%s2 + $0x20] sm:$0xf]
  %v1285 = vld [vmem:[%s2 + $0x24] sm:$0xf]
  %v1286 = vld [vmem:[%s2 + $0x28] sm:$0xf]
  %v1287 = vld [vmem:[%s2 + $0x2c] sm:$0xf]
  %v1288 = vld [vmem:[%s2 + $0x30] sm:$0xf]
  %v1289 = vld [vmem:[%s2 + $0x34] sm:$0xf]
  %v1290 = vld [vmem:[%s2 + $0x38] sm:$0xf]
  %v1291 = vld [vmem:[%s2 + $0x3c] sm:$0xf]
  %v1292 = vld [vmem:[%s2 + $0x40] sm:$0xf]
  %v1293 = vld [vmem:[%s2 + $0x44] sm:$0xf]
  %v1294 = vld [vmem:[%s2 + $0x48] sm:$0xf]
  %v1295 = vld [vmem:[%s2 + $0x4c] sm:$0xf]
  %v1296 = vld [vmem:[%s2 + $0x50] sm:$0xf]
  %v1297 = vld [vmem:[%s2 + $0x54] sm:$0xf]
  %v1298 = vld [vmem:[%s2 + $0x58] sm:$0xf]
  %v1299 = vld [vmem:[%s2 + $0x5c] sm:$0xf]
  %v1300 = vld [vmem:[%s2 + $0x60] sm:$0xf]
  %v1301 = vld [vmem:[%s2 + $0x64] sm:$0xf]
  %v1302 = vld [vmem:[%s2 + $0x68] sm:$0xf]
  %v1303 = vld [vmem:[%s2 + $0x6c] sm:$0xf]
  %v1304 = vld [vmem:[%s2 + $0x70] sm:$0xf]
  %v1305 = vld [vmem:[%s2 + $0x74] sm:$0xf]
  %v1306 = vld [vmem:[%s2 + $0x78] sm:$0xf]
  %v1307 = vld [vmem:[%s2 + $0x7c] sm:$0xf]
  %v1308 = vld [vmem:[%s2 + $0x80] sm:$0xf]
  %v1309 = vld [vmem:[%s2 + $0x84] sm:$0xf]
  %v1310 = vld [vmem:[%s2 + $0x88] sm:$0xf]
  %v1311 = vld [vmem:[%s2 + $0x8c] sm:$0xf]
  %v1312 = vld [vmem:[%s2 + $0x90] sm:$0xf]
  %v1313 = vld [vmem:[%s2 + $0x94] sm:$0xf]
  %v1314 = vld [vmem:[%s2 + $0x98] sm:$0xf]
  %v1315 = vld [vmem:[%s2 + $0x9c] sm:$0xf]
  %v1316 = vld [vmem:[%s2 + $0xa0] sm:$0xf]
  %v1317 = vld [vmem:[%s2 + $0xa4] sm:$0xf]
  %v1318 = vld [vmem:[%s2 + $0xa8] sm:$0xf]
  %v1319 = vld [vmem:[%s2 + $0xac] sm:$0xf]
  %v1320 = vld [vmem:[%s2 + $0xb0] sm:$0xf]
  %v1321 = vld [vmem:[%s2 + $0xb4] sm:$0xf]
  %v1322 = vld [vmem:[%s2 + $0xb8] sm:$0xf]
  %v1323 = vld [vmem:[%s2 + $0xbc] sm:$0xf]
  %v1324 = vld [vmem:[%s2 + $0xc0] sm:$0xf]
  %v1325 = vld [vmem:[%s2 + $0xc4] sm:$0xf]
  %v1326 = vld [vmem:[%s2 + $0xc8] sm:$0xf]
  %v1327 = vld [vmem:[%s2 + $0xcc] sm:$0xf]
  %v1328 = vld [vmem:[%s2 + $0xd0] sm:$0xf]
  %v1329 = vld [vmem:[%s2 + $0xd4] sm:$0xf]
  %v1330 = vld [vmem:[%s2 + $0xd8] sm:$0xf]
  %v1331 = vld [vmem:[%s2 + $0xdc] sm:$0xf]
  %v1332 = vld [vmem:[%s2 + $0xe0] sm:$0xf]
  %v1333 = vld [vmem:[%s2 + $0xe4] sm:$0xf]
  %v1334 = vld [vmem:[%s2 + $0xe8] sm:$0xf]
  %v1335 = vld [vmem:[%s2 + $0xec] sm:$0xf]
  %v1336 = vld [vmem:[%s2 + $0xf0] sm:$0xf]
  %v1337 = vld [vmem:[%s2 + $0xf4] sm:$0xf]
  %v1338 = vld [vmem:[%s2 + $0xf8] sm:$0xf]
  %v1339 = vld [vmem:[%s2 + $0xfc] sm:$0xf]
  %v1340 = vld [vmem:[%s5] sm:$0xf]
  %v1341 = vld [vmem:[%s5 + $0x4] sm:$0xf]
  %v1342 = vld [vmem:[%s5 + $0x8] sm:$0xf]
  %v1407 = vunpack.c.l.b16 %v1276
  %v1408 = vunpack.c.l.b16 %v1277
  %v1409 = vunpack.c.l.b16 %v1278
  %v1410 = vunpack.c.l.b16 %v1279
  %v1411 = vunpack.c.l.b16 %v1280
  %v1412 = vunpack.c.l.b16 %v1281
  %v1413 = vunpack.c.l.b16 %v1282
  %v1414 = vunpack.c.l.b16 %v1283
  %v1415 = vunpack.c.l.b16 %v1284
  %v1416 = vunpack.c.l.b16 %v1285
  %v1417 = vunpack.c.l.b16 %v1286
  %v1418 = vunpack.c.l.b16 %v1287
  %v1419 = vunpack.c.l.b16 %v1288
  %v1420 = vunpack.c.l.b16 %v1289
  %v1421 = vunpack.c.l.b16 %v1290
  %v1422 = vunpack.c.l.b16 %v1291
  %v1423 = vunpack.c.l.b16 %v1292
  %v1424 = vunpack.c.l.b16 %v1293
  %v1425 = vunpack.c.l.b16 %v1294
  %v1426 = vunpack.c.l.b16 %v1295
  %v1427 = vunpack.c.l.b16 %v1296
  %v1428 = vunpack.c.l.b16 %v1297
  %v1429 = vunpack.c.l.b16 %v1298
  %v1430 = vunpack.c.l.b16 %v1299
  %v1431 = vunpack.c.l.b16 %v1300
  %v1432 = vunpack.c.l.b16 %v1301
  %v1433 = vunpack.c.l.b16 %v1302
  %v1434 = vunpack.c.l.b16 %v1303
  %v1435 = vunpack.c.l.b16 %v1304
  %v1436 = vunpack.c.l.b16 %v1305
  %v1437 = vunpack.c.l.b16 %v1306
  %v1438 = vunpack.c.l.b16 %v1307
  %v1439 = vunpack.c.l.b16 %v1308
  %v1440 = vunpack.c.l.b16 %v1309
  %v1441 = vunpack.c.l.b16 %v1310
  %v1442 = vunpack.c.l.b16 %v1311
  %v1443 = vunpack.c.l.b16 %v1312
  %v1444 = vunpack.c.l.b16 %v1313
  %v1445 = vunpack.c.l.b16 %v1314
  %v1446 = vunpack.c.l.b16 %v1315
  %v1447 = vunpack.c.l.b16 %v1316
  %v1448 = vunpack.c.l.b16 %v1317
  %v1449 = vunpack.c.l.b16 %v1318
  %v1450 = vunpack.c.l.b16 %v1319
  %v1451 = vunpack.c.l.b16 %v1320
  %v1452 = vunpack.c.l.b16 %v1321
  %v1453 = vunpack.c.l.b16 %v1322
  %v1454 = vunpack.c.l.b16 %v1323
  %v1455 = vunpack.c.l.b16 %v1324
  %v1456 = vunpack.c.l.b16 %v1325
  %v1457 = vunpack.c.l.b16 %v1326
  %v1458 = vunpack.c.l.b16 %v1327
  %v1459 = vunpack.c.l.b16 %v1328
  %v1460 = vunpack.c.l.b16 %v1329
  %v1461 = vunpack.c.l.b16 %v1330
  %v1462 = vunpack.c.l.b16 %v1331
  %v1463 = vunpack.c.l.b16 %v1332
  %v1464 = vunpack.c.l.b16 %v1333
  %v1465 = vunpack.c.l.b16 %v1334
  %v1466 = vunpack.c.l.b16 %v1335
  %v1467 = vunpack.c.l.b16 %v1336
  %v1468 = vunpack.c.l.b16 %v1337
  %v1469 = vunpack.c.l.b16 %v1338
  %v1470 = vunpack.c.l.b16 %v1339
  %v1471 = vpack.c.b16 %v1408, %v1407
  %v1472 = vpack.c.b16 %v1410, %v1409
  %v1473 = vpack.c.b16 %v1412, %v1411
  %v1474 = vpack.c.b16 %v1414, %v1413
  %v1475 = vpack.c.b16 %v1416, %v1415
  %v1476 = vpack.c.b16 %v1418, %v1417
  %v1477 = vpack.c.b16 %v1420, %v1419
  %v1478 = vpack.c.b16 %v1422, %v1421
  %v1479 = vpack.c.b16 %v1424, %v1423
  %v1480 = vpack.c.b16 %v1426, %v1425
  %v1481 = vpack.c.b16 %v1428, %v1427
  %v1482 = vpack.c.b16 %v1430, %v1429
  %v1483 = vpack.c.b16 %v1432, %v1431
  %v1484 = vpack.c.b16 %v1434, %v1433
  %v1485 = vpack.c.b16 %v1436, %v1435
  %v1486 = vpack.c.b16 %v1438, %v1437
  %v1487 = vpack.c.b16 %v1440, %v1439
  %v1488 = vpack.c.b16 %v1442, %v1441
  %v1489 = vpack.c.b16 %v1444, %v1443
  %v1490 = vpack.c.b16 %v1446, %v1445
  %v1491 = vpack.c.b16 %v1448, %v1447
  %v1492 = vpack.c.b16 %v1450, %v1449
  %v1493 = vpack.c.b16 %v1452, %v1451
  %v1494 = vpack.c.b16 %v1454, %v1453
  %v1495 = vpack.c.b16 %v1456, %v1455
  %v1496 = vpack.c.b16 %v1458, %v1457
  %v1497 = vpack.c.b16 %v1460, %v1459
  %v1498 = vpack.c.b16 %v1462, %v1461
  %v1499 = vpack.c.b16 %v1464, %v1463
  %v1500 = vpack.c.b16 %v1466, %v1465
  %v1501 = vpack.c.b16 %v1468, %v1467
  %v1502 = vpack.c.b16 %v1470, %v1469
  %v1506 = vunpack.c.l.b16 %v1340
  %v1507 = vunpack.c.l.b16 %v1341
  %v1508 = vunpack.c.l.b16 %v1342
  %v1509 = vpack.c.b16 %v1507, %v1506
  %v1510 = vpack.c.b16 %v1508, %v1508
  %v1513 = vsel %vm334, %v1471, 0
  %v1516 = vsel %vm334, %v1472, 0
  %v1519 = vsel %vm334, %v1473, 0
  %v1522 = vsel %vm334, %v1474, 0
  %v1525 = vsel %vm334, %v1475, 0
  %v1528 = vsel %vm334, %v1476, 0
  %v1531 = vsel %vm334, %v1477, 0
  %v1534 = vsel %vm334, %v1478, 0
  %v1537 = vsel %vm334, %v1479, 0
  %v1540 = vsel %vm334, %v1480, 0
  %v1543 = vsel %vm334, %v1481, 0
  %v1546 = vsel %vm334, %v1482, 0
  %v1549 = vsel %vm334, %v1483, 0
  %v1552 = vsel %vm334, %v1484, 0
  %v1555 = vsel %vm334, %v1485, 0
  %v1558 = vsel %vm334, %v1486, 0
  %v1561 = vsel %vm334, %v1487, 0
  %v1564 = vsel %vm334, %v1488, 0
  %v1567 = vsel %vm334, %v1489, 0
  %v1570 = vsel %vm334, %v1490, 0
  %v1573 = vsel %vm334, %v1491, 0
  %v1576 = vsel %vm334, %v1492, 0
  %v1579 = vsel %vm334, %v1493, 0
  %v1582 = vsel %vm334, %v1494, 0
  %v1585 = vsel %vm334, %v1495, 0
  %v1588 = vsel %vm334, %v1496, 0
  %v1591 = vsel %vm334, %v1497, 0
  %v1594 = vsel %vm334, %v1498, 0
  %v1597 = vsel %vm334, %v1499, 0
  %v1600 = vsel %vm334, %v1500, 0
  %v1603 = vsel %vm334, %v1501, 0
  %v1606 = vsel %vm334, %v1502, 0
  %v1609 = vsel %vm431, %v1510, 0
  %1611 = vmatprep.subr.bf16.mxu0 0
  %1612 = vmatpush1.bf16.msra.mxu0 0
  %1613 = vmatprep.subr.bf16.mxu0 0
  %1614 = vmatpush1.bf16.msra.mxu0 0
  %1615 = vmatprep.subr.bf16.mxu0 0
  %1616 = vmatpush1.bf16.msra.mxu0 0
  %1617 = vmatprep.subr.bf16.mxu0 0
  %1618 = vmatpush1.bf16.msra.mxu0 0
  %1619 = vmatprep.subr.bf16.mxu0 0
  %1620 = vmatpush1.bf16.msra.mxu0 0
  %1621 = vmatprep.subr.bf16.mxu0 0
  %1622 = vmatpush1.bf16.msra.mxu0 0
  %1623 = vmatprep.subr.bf16.mxu0 0
  %1624 = vmatpush1.bf16.msra.mxu0 %v1609
  %1625 = vmatprep.subr.bf16.mxu0 0
  %1626 = vmatpush1.bf16.msra.mxu0 %v1509
  %1627 = vmatprep.subr.bf16.mxu0 0
  %1628 = vmatpush2.bf16.msra.mxu0 0
  %1629 = vmatprep.subr.bf16.mxu0 0
  %1630 = vmatpush2.bf16.msra.mxu0 0
  %1631 = vmatprep.subr.bf16.mxu0 0
  %1632 = vmatpush2.bf16.msra.mxu0 0
  %1633 = vmatprep.subr.bf16.mxu0 0
  %1634 = vmatpush2.bf16.msra.mxu0 0
  %1635 = vmatprep.subr.bf16.mxu0 0
  %1636 = vmatpush2.bf16.msra.mxu0 0
  %1637 = vmatprep.subr.bf16.mxu0 0
  %1638 = vmatpush2.bf16.msra.mxu0 0
  %1639 = vmatprep.subr.bf16.mxu0 0
  %1640 = vmatpush2.bf16.msra.mxu0 0
  %1641 = vmatprep.subr.bf16.mxu0 0
  %1642 = vmatpush2.bf16.msra.mxu0 0
  %1643 = vmatprep.mubr.bf16.mxu0 0
  %1644 = vmatmul.mubr.bf16.gmra.mxu0 %v1513
  %v1645 = vpop.f32.mrf.mxu0
  %v1646 = vadd.f32 0.0, %v1645
  %v1647 = vpop.f32.mrf.mxu0
  %v1648 = vpop.f32.mrf.mxu0
  %v1649 = vadd.f32 0.0, %v1648
  %v1650 = vpop.f32.mrf.mxu0
  %1651 = vmatprep.mubr.bf16.mxu0 0
  %1652 = vmatmul.mubr.bf16.gmra.mxu0 %v1516
  %v1653 = vpop.f32.mrf.mxu0
  %v1654 = vadd.f32 0.0, %v1653
  %v1655 = vpop.f32.mrf.mxu0
  %v1656 = vpop.f32.mrf.mxu0
  %v1657 = vadd.f32 0.0, %v1656
  %v1658 = vpop.f32.mrf.mxu0
  %1659 = vmatprep.mubr.bf16.mxu0 0
  %1660 = vmatmul.mubr.bf16.gmra.mxu0 %v1519
  %v1661 = vpop.f32.mrf.mxu0
  %v1662 = vadd.f32 0.0, %v1661
  %v1663 = vpop.f32.mrf.mxu0
  %v1664 = vpop.f32.mrf.mxu0
  %v1665 = vadd.f32 0.0, %v1664
  %v1666 = vpop.f32.mrf.mxu0
  %1667 = vmatprep.mubr.bf16.mxu0 0
  %1668 = vmatmul.mubr.bf16.gmra.mxu0 %v1522
  %v1669 = vpop.f32.mrf.mxu0
  %v1670 = vadd.f32 0.0, %v1669
  %v1671 = vpop.f32.mrf.mxu0
  %v1672 = vpop.f32.mrf.mxu0
  %v1673 = vadd.f32 0.0, %v1672
  %v1674 = vpop.f32.mrf.mxu0
  %1675 = vmatprep.mubr.bf16.mxu0 0
  %1676 = vmatmul.mubr.bf16.gmra.mxu0 %v1525
  %v1677 = vpop.f32.mrf.mxu0
  %v1678 = vadd.f32 0.0, %v1677
  %v1679 = vpop.f32.mrf.mxu0
  %v1680 = vpop.f32.mrf.mxu0
  %v1681 = vadd.f32 0.0, %v1680
  %v1682 = vpop.f32.mrf.mxu0
  %1683 = vmatprep.mubr.bf16.mxu0 0
  %1684 = vmatmul.mubr.bf16.gmra.mxu0 %v1528
  %v1685 = vpop.f32.mrf.mxu0
  %v1686 = vadd.f32 0.0, %v1685
  %v1687 = vpop.f32.mrf.mxu0
  %v1688 = vpop.f32.mrf.mxu0
  %v1689 = vadd.f32 0.0, %v1688
  %v1690 = vpop.f32.mrf.mxu0
  %1691 = vmatprep.mubr.bf16.mxu0 0
  %1692 = vmatmul.mubr.bf16.gmra.mxu0 %v1531
  %v1693 = vpop.f32.mrf.mxu0
  %v1694 = vadd.f32 0.0, %v1693
  %v1695 = vpop.f32.mrf.mxu0
  %v1696 = vpop.f32.mrf.mxu0
  %v1697 = vadd.f32 0.0, %v1696
  %v1698 = vpop.f32.mrf.mxu0
  %1699 = vmatprep.mubr.bf16.mxu0 0
  %1700 = vmatmul.mubr.bf16.gmra.mxu0 %v1534
  %v1701 = vpop.f32.mrf.mxu0
  %v1702 = vadd.f32 0.0, %v1701
  %v1703 = vpop.f32.mrf.mxu0
  %v1704 = vpop.f32.mrf.mxu0
  %v1705 = vadd.f32 0.0, %v1704
  %v1706 = vpop.f32.mrf.mxu0
  %1707 = vmatprep.mubr.bf16.mxu0 0
  %1708 = vmatmul.mubr.bf16.gmra.mxu0 %v1537
  %v1709 = vpop.f32.mrf.mxu0
  %v1710 = vadd.f32 0.0, %v1709
  %v1711 = vpop.f32.mrf.mxu0
  %v1712 = vpop.f32.mrf.mxu0
  %v1713 = vadd.f32 0.0, %v1712
  %v1714 = vpop.f32.mrf.mxu0
  %1715 = vmatprep.mubr.bf16.mxu0 0
  %1716 = vmatmul.mubr.bf16.gmra.mxu0 %v1540
  %v1717 = vpop.f32.mrf.mxu0
  %v1718 = vadd.f32 0.0, %v1717
  %v1719 = vpop.f32.mrf.mxu0
  %v1720 = vpop.f32.mrf.mxu0
  %v1721 = vadd.f32 0.0, %v1720
  %v1722 = vpop.f32.mrf.mxu0
  %1723 = vmatprep.mubr.bf16.mxu0 0
  %1724 = vmatmul.mubr.bf16.gmra.mxu0 %v1543
  %v1725 = vpop.f32.mrf.mxu0
  %v1726 = vadd.f32 0.0, %v1725
  %v1727 = vpop.f32.mrf.mxu0
  %v1728 = vpop.f32.mrf.mxu0
  %v1729 = vadd.f32 0.0, %v1728
  %v1730 = vpop.f32.mrf.mxu0
  %1731 = vmatprep.mubr.bf16.mxu0 0
  %1732 = vmatmul.mubr.bf16.gmra.mxu0 %v1546
  %v1733 = vpop.f32.mrf.mxu0
  %v1734 = vadd.f32 0.0, %v1733
  %v1735 = vpop.f32.mrf.mxu0
  %v1736 = vpop.f32.mrf.mxu0
  %v1737 = vadd.f32 0.0, %v1736
  %v1738 = vpop.f32.mrf.mxu0
  %1739 = vmatprep.mubr.bf16.mxu0 0
  %1740 = vmatmul.mubr.bf16.gmra.mxu0 %v1549
  %v1741 = vpop.f32.mrf.mxu0
  %v1742 = vadd.f32 0.0, %v1741
  %v1743 = vpop.f32.mrf.mxu0
  %v1744 = vpop.f32.mrf.mxu0
  %v1745 = vadd.f32 0.0, %v1744
  %v1746 = vpop.f32.mrf.mxu0
  %1747 = vmatprep.mubr.bf16.mxu0 0
  %1748 = vmatmul.mubr.bf16.gmra.mxu0 %v1552
  %v1749 = vpop.f32.mrf.mxu0
  %v1750 = vadd.f32 0.0, %v1749
  %v1751 = vpop.f32.mrf.mxu0
  %v1752 = vpop.f32.mrf.mxu0
  %v1753 = vadd.f32 0.0, %v1752
  %v1754 = vpop.f32.mrf.mxu0
  %1755 = vmatprep.mubr.bf16.mxu0 0
  %1756 = vmatmul.mubr.bf16.gmra.mxu0 %v1555
  %v1757 = vpop.f32.mrf.mxu0
  %v1758 = vadd.f32 0.0, %v1757
  %v1759 = vpop.f32.mrf.mxu0
  %v1760 = vpop.f32.mrf.mxu0
  %v1761 = vadd.f32 0.0, %v1760
  %v1762 = vpop.f32.mrf.mxu0
  %1763 = vmatprep.mubr.bf16.mxu0 0
  %1764 = vmatmul.mubr.bf16.gmra.mxu0 %v1558
  %v1765 = vpop.f32.mrf.mxu0
  %v1766 = vadd.f32 0.0, %v1765
  %v1767 = vpop.f32.mrf.mxu0
  %v1768 = vpop.f32.mrf.mxu0
  %v1769 = vadd.f32 0.0, %v1768
  %v1770 = vpop.f32.mrf.mxu0
  %1771 = vmatprep.mubr.bf16.mxu0 0
  %1772 = vmatmul.mubr.bf16.gmra.mxu0 %v1561
  %v1773 = vpop.f32.mrf.mxu0
  %v1774 = vadd.f32 0.0, %v1773
  %v1775 = vpop.f32.mrf.mxu0
  %v1776 = vpop.f32.mrf.mxu0
  %v1777 = vadd.f32 0.0, %v1776
  %v1778 = vpop.f32.mrf.mxu0
  %1779 = vmatprep.mubr.bf16.mxu0 0
  %1780 = vmatmul.mubr.bf16.gmra.mxu0 %v1564
  %v1781 = vpop.f32.mrf.mxu0
  %v1782 = vadd.f32 0.0, %v1781
  %v1783 = vpop.f32.mrf.mxu0
  %v1784 = vpop.f32.mrf.mxu0
  %v1785 = vadd.f32 0.0, %v1784
  %v1786 = vpop.f32.mrf.mxu0
  %1787 = vmatprep.mubr.bf16.mxu0 0
  %1788 = vmatmul.mubr.bf16.gmra.mxu0 %v1567
  %v1789 = vpop.f32.mrf.mxu0
  %v1790 = vadd.f32 0.0, %v1789
  %v1791 = vpop.f32.mrf.mxu0
  %v1792 = vpop.f32.mrf.mxu0
  %v1793 = vadd.f32 0.0, %v1792
  %v1794 = vpop.f32.mrf.mxu0
  %1795 = vmatprep.mubr.bf16.mxu0 0
  %1796 = vmatmul.mubr.bf16.gmra.mxu0 %v1570
  %v1797 = vpop.f32.mrf.mxu0
  %v1798 = vadd.f32 0.0, %v1797
  %v1799 = vpop.f32.mrf.mxu0
  %v1800 = vpop.f32.mrf.mxu0
  %v1801 = vadd.f32 0.0, %v1800
  %v1802 = vpop.f32.mrf.mxu0
  %1803 = vmatprep.mubr.bf16.mxu0 0
  %1804 = vmatmul.mubr.bf16.gmra.mxu0 %v1573
  %v1805 = vpop.f32.mrf.mxu0
  %v1806 = vadd.f32 0.0, %v1805
  %v1807 = vpop.f32.mrf.mxu0
  %v1808 = vpop.f32.mrf.mxu0
  %v1809 = vadd.f32 0.0, %v1808
  %v1810 = vpop.f32.mrf.mxu0
  %1811 = vmatprep.mubr.bf16.mxu0 0
  %1812 = vmatmul.mubr.bf16.gmra.mxu0 %v1576
  %v1813 = vpop.f32.mrf.mxu0
  %v1814 = vadd.f32 0.0, %v1813
  %v1815 = vpop.f32.mrf.mxu0
  %v1816 = vpop.f32.mrf.mxu0
  %v1817 = vadd.f32 0.0, %v1816
  %v1818 = vpop.f32.mrf.mxu0
  %1819 = vmatprep.mubr.bf16.mxu0 0
  %1820 = vmatmul.mubr.bf16.gmra.mxu0 %v1579
  %v1821 = vpop.f32.mrf.mxu0
  %v1822 = vadd.f32 0.0, %v1821
  %v1823 = vpop.f32.mrf.mxu0
  %v1824 = vpop.f32.mrf.mxu0
  %v1825 = vadd.f32 0.0, %v1824
  %v1826 = vpop.f32.mrf.mxu0
  %1827 = vmatprep.mubr.bf16.mxu0 0
  %1828 = vmatmul.mubr.bf16.gmra.mxu0 %v1582
  %v1829 = vpop.f32.mrf.mxu0
  %v1830 = vadd.f32 0.0, %v1829
  %v1831 = vpop.f32.mrf.mxu0
  %v1832 = vpop.f32.mrf.mxu0
  %v1833 = vadd.f32 0.0, %v1832
  %v1834 = vpop.f32.mrf.mxu0
  %1835 = vmatprep.mubr.bf16.mxu0 0
  %1836 = vmatmul.mubr.bf16.gmra.mxu0 %v1585
  %v1837 = vpop.f32.mrf.mxu0
  %v1838 = vadd.f32 0.0, %v1837
  %v1839 = vpop.f32.mrf.mxu0
  %v1840 = vpop.f32.mrf.mxu0
  %v1841 = vadd.f32 0.0, %v1840
  %v1842 = vpop.f32.mrf.mxu0
  %1843 = vmatprep.mubr.bf16.mxu0 0
  %1844 = vmatmul.mubr.bf16.gmra.mxu0 %v1588
  %v1845 = vpop.f32.mrf.mxu0
  %v1846 = vadd.f32 0.0, %v1845
  %v1847 = vpop.f32.mrf.mxu0
  %v1848 = vpop.f32.mrf.mxu0
  %v1849 = vadd.f32 0.0, %v1848
  %v1850 = vpop.f32.mrf.mxu0
  %1851 = vmatprep.mubr.bf16.mxu0 0
  %1852 = vmatmul.mubr.bf16.gmra.mxu0 %v1591
  %v1853 = vpop.f32.mrf.mxu0
  %v1854 = vadd.f32 0.0, %v1853
  %v1855 = vpop.f32.mrf.mxu0
  %v1856 = vpop.f32.mrf.mxu0
  %v1857 = vadd.f32 0.0, %v1856
  %v1858 = vpop.f32.mrf.mxu0
  %1859 = vmatprep.mubr.bf16.mxu0 0
  %1860 = vmatmul.mubr.bf16.gmra.mxu0 %v1594
  %v1861 = vpop.f32.mrf.mxu0
  %v1862 = vadd.f32 0.0, %v1861
  %v1863 = vpop.f32.mrf.mxu0
  %v1864 = vpop.f32.mrf.mxu0
  %v1865 = vadd.f32 0.0, %v1864
  %v1866 = vpop.f32.mrf.mxu0
  %1867 = vmatprep.mubr.bf16.mxu0 0
  %1868 = vmatmul.mubr.bf16.gmra.mxu0 %v1597
  %v1869 = vpop.f32.mrf.mxu0
  %v1870 = vadd.f32 0.0, %v1869
  %v1871 = vpop.f32.mrf.mxu0
  %v1872 = vpop.f32.mrf.mxu0
  %v1873 = vadd.f32 0.0, %v1872
  %v1874 = vpop.f32.mrf.mxu0
  %1875 = vmatprep.mubr.bf16.mxu0 0
  %1876 = vmatmul.mubr.bf16.gmra.mxu0 %v1600
  %v1877 = vpop.f32.mrf.mxu0
  %v1878 = vadd.f32 0.0, %v1877
  %v1879 = vpop.f32.mrf.mxu0
  %v1880 = vpop.f32.mrf.mxu0
  %v1881 = vadd.f32 0.0, %v1880
  %v1882 = vpop.f32.mrf.mxu0
  %1883 = vmatprep.mubr.bf16.mxu0 0
  %1884 = vmatmul.mubr.bf16.gmra.mxu0 %v1603
  %v1885 = vpop.f32.mrf.mxu0
  %v1886 = vadd.f32 0.0, %v1885
  %v1887 = vpop.f32.mrf.mxu0
  %v1888 = vpop.f32.mrf.mxu0
  %v1889 = vadd.f32 0.0, %v1888
  %v1890 = vpop.f32.mrf.mxu0
  %1891 = vmatprep.mubr.bf16.mxu0 0
  %1892 = vmatmul.mubr.bf16.gmra.mxu0 %v1606
  %v1893 = vpop.f32.mrf.mxu0
  %v1894 = vadd.f32 0.0, %v1893
  %v1895 = vpop.f32.mrf.mxu0
  %v1896 = vpop.f32.mrf.mxu0
  %v1897 = vadd.f32 0.0, %v1896
  %v1898 = vpop.f32.mrf.mxu0
  %1899 = vdwg.mxu0
  %v1900 = vadd.f32 %v1022, %v1646
  %v1901 = vadd.f32 %v1025, %v1649
  %v1902 = vadd.f32 %v1030, %v1654
  %v1903 = vadd.f32 %v1033, %v1657
  %v1904 = vadd.f32 %v1038, %v1662
  %v1905 = vadd.f32 %v1041, %v1665
  %v1906 = vadd.f32 %v1046, %v1670
  %v1907 = vadd.f32 %v1049, %v1673
  %v1908 = vadd.f32 %v1054, %v1678
  %v1909 = vadd.f32 %v1057, %v1681
  %v1910 = vadd.f32 %v1062, %v1686
  %v1911 = vadd.f32 %v1065, %v1689
  %v1912 = vadd.f32 %v1070, %v1694
  %v1913 = vadd.f32 %v1073, %v1697
  %v1914 = vadd.f32 %v1078, %v1702
  %v1915 = vadd.f32 %v1081, %v1705
  %v1916 = vadd.f32 %v1086, %v1710
  %v1917 = vadd.f32 %v1089, %v1713
  %v1918 = vadd.f32 %v1094, %v1718
  %v1919 = vadd.f32 %v1097, %v1721
  %v1920 = vadd.f32 %v1102, %v1726
  %v1921 = vadd.f32 %v1105, %v1729
  %v1922 = vadd.f32 %v1110, %v1734
  %v1923 = vadd.f32 %v1113, %v1737
  %v1924 = vadd.f32 %v1118, %v1742
  %v1925 = vadd.f32 %v1121, %v1745
  %v1926 = vadd.f32 %v1126, %v1750
  %v1927 = vadd.f32 %v1129, %v1753
  %v1928 = vadd.f32 %v1134, %v1758
  %v1929 = vadd.f32 %v1137, %v1761
  %v1930 = vadd.f32 %v1142, %v1766
  %v1931 = vadd.f32 %v1145, %v1769
  %v1932 = vadd.f32 %v1150, %v1774
  %v1933 = vadd.f32 %v1153, %v1777
  %v1934 = vadd.f32 %v1158, %v1782
  %v1935 = vadd.f32 %v1161, %v1785
  %v1936 = vadd.f32 %v1166, %v1790
  %v1937 = vadd.f32 %v1169, %v1793
  %v1938 = vadd.f32 %v1174, %v1798
  %v1939 = vadd.f32 %v1177, %v1801
  %v1940 = vadd.f32 %v1182, %v1806
  %v1941 = vadd.f32 %v1185, %v1809
  %v1942 = vadd.f32 %v1190, %v1814
  %v1943 = vadd.f32 %v1193, %v1817
  %v1944 = vadd.f32 %v1198, %v1822
  %v1945 = vadd.f32 %v1201, %v1825
  %v1946 = vadd.f32 %v1206, %v1830
  %v1947 = vadd.f32 %v1209, %v1833
  %v1948 = vadd.f32 %v1214, %v1838
  %v1949 = vadd.f32 %v1217, %v1841
  %v1950 = vadd.f32 %v1222, %v1846
  %v1951 = vadd.f32 %v1225, %v1849
  %v1952 = vadd.f32 %v1230, %v1854
  %v1953 = vadd.f32 %v1233, %v1857
  %v1954 = vadd.f32 %v1238, %v1862
  %v1955 = vadd.f32 %v1241, %v1865
  %v1956 = vadd.f32 %v1246, %v1870
  %v1957 = vadd.f32 %v1249, %v1873
  %v1958 = vadd.f32 %v1254, %v1878
  %v1959 = vadd.f32 %v1257, %v1881
  %v1960 = vadd.f32 %v1262, %v1886
  %v1961 = vadd.f32 %v1265, %v1889
  %v1962 = vadd.f32 %v1270, %v1894
  %v1963 = vadd.f32 %v1273, %v1897
  %v1964 = vmax.f32 %v1900, 0.0
  %v1965 = vmax.f32 %v1901, 0.0
  %v1966 = vmax.f32 %v1902, 0.0
  %v1967 = vmax.f32 %v1903, 0.0
  %v1968 = vmax.f32 %v1904, 0.0
  %v1969 = vmax.f32 %v1905, 0.0
  %v1970 = vmax.f32 %v1906, 0.0
  %v1971 = vmax.f32 %v1907, 0.0
  %v1972 = vmax.f32 %v1908, 0.0
  %v1973 = vmax.f32 %v1909, 0.0
  %v1974 = vmax.f32 %v1910, 0.0
  %v1975 = vmax.f32 %v1911, 0.0
  %v1976 = vmax.f32 %v1912, 0.0
  %v1977 = vmax.f32 %v1913, 0.0
  %v1978 = vmax.f32 %v1914, 0.0
  %v1979 = vmax.f32 %v1915, 0.0
  %v1980 = vmax.f32 %v1916, 0.0
  %v1981 = vmax.f32 %v1917, 0.0
  %v1982 = vmax.f32 %v1918, 0.0
  %v1983 = vmax.f32 %v1919, 0.0
  %v1984 = vmax.f32 %v1920, 0.0
  %v1985 = vmax.f32 %v1921, 0.0
  %v1986 = vmax.f32 %v1922, 0.0
  %v1987 = vmax.f32 %v1923, 0.0
  %v1988 = vmax.f32 %v1924, 0.0
  %v1989 = vmax.f32 %v1925, 0.0
  %v1990 = vmax.f32 %v1926, 0.0
  %v1991 = vmax.f32 %v1927, 0.0
  %v1992 = vmax.f32 %v1928, 0.0
  %v1993 = vmax.f32 %v1929, 0.0
  %v1994 = vmax.f32 %v1930, 0.0
  %v1995 = vmax.f32 %v1931, 0.0
  %v1996 = vmax.f32 %v1932, 0.0
  %v1997 = vmax.f32 %v1933, 0.0
  %v1998 = vmax.f32 %v1934, 0.0
  %v1999 = vmax.f32 %v1935, 0.0
  %v2000 = vmax.f32 %v1936, 0.0
  %v2001 = vmax.f32 %v1937, 0.0
  %v2002 = vmax.f32 %v1938, 0.0
  %v2003 = vmax.f32 %v1939, 0.0
  %v2004 = vmax.f32 %v1940, 0.0
  %v2005 = vmax.f32 %v1941, 0.0
  %v2006 = vmax.f32 %v1942, 0.0
  %v2007 = vmax.f32 %v1943, 0.0
  %v2008 = vmax.f32 %v1944, 0.0
  %v2009 = vmax.f32 %v1945, 0.0
  %v2010 = vmax.f32 %v1946, 0.0
  %v2011 = vmax.f32 %v1947, 0.0
  %v2012 = vmax.f32 %v1948, 0.0
  %v2013 = vmax.f32 %v1949, 0.0
  %v2014 = vmax.f32 %v1950, 0.0
  %v2015 = vmax.f32 %v1951, 0.0
  %v2016 = vmax.f32 %v1952, 0.0
  %v2017 = vmax.f32 %v1953, 0.0
  %v2018 = vmax.f32 %v1954, 0.0
  %v2019 = vmax.f32 %v1955, 0.0
  %v2020 = vmax.f32 %v1956, 0.0
  %v2021 = vmax.f32 %v1957, 0.0
  %v2022 = vmax.f32 %v1958, 0.0
  %v2023 = vmax.f32 %v1959, 0.0
  %v2024 = vmax.f32 %v1960, 0.0
  %v2025 = vmax.f32 %v1961, 0.0
  %v2026 = vmax.f32 %v1962, 0.0
  %v2027 = vmax.f32 %v1963, 0.0
  %v2028 = vpack.c.bf16 %v1965, %v1964
  %v2029 = vpack.c.bf16 %v1967, %v1966
  %v2030 = vpack.c.bf16 %v1969, %v1968
  %v2031 = vpack.c.bf16 %v1971, %v1970
  %v2032 = vpack.c.bf16 %v1973, %v1972
  %v2033 = vpack.c.bf16 %v1975, %v1974
  %v2034 = vpack.c.bf16 %v1977, %v1976
  %v2035 = vpack.c.bf16 %v1979, %v1978
  %v2036 = vpack.c.bf16 %v1981, %v1980
  %v2037 = vpack.c.bf16 %v1983, %v1982
  %v2038 = vpack.c.bf16 %v1985, %v1984
  %v2039 = vpack.c.bf16 %v1987, %v1986
  %v2040 = vpack.c.bf16 %v1989, %v1988
  %v2041 = vpack.c.bf16 %v1991, %v1990
  %v2042 = vpack.c.bf16 %v1993, %v1992
  %v2043 = vpack.c.bf16 %v1995, %v1994
  %v2044 = vpack.c.bf16 %v1997, %v1996
  %v2045 = vpack.c.bf16 %v1999, %v1998
  %v2046 = vpack.c.bf16 %v2001, %v2000
  %v2047 = vpack.c.bf16 %v2003, %v2002
  %v2048 = vpack.c.bf16 %v2005, %v2004
  %v2049 = vpack.c.bf16 %v2007, %v2006
  %v2050 = vpack.c.bf16 %v2009, %v2008
  %v2051 = vpack.c.bf16 %v2011, %v2010
  %v2052 = vpack.c.bf16 %v2013, %v2012
  %v2053 = vpack.c.bf16 %v2015, %v2014
  %v2054 = vpack.c.bf16 %v2017, %v2016
  %v2055 = vpack.c.bf16 %v2019, %v2018
  %v2056 = vpack.c.bf16 %v2021, %v2020
  %v2057 = vpack.c.bf16 %v2023, %v2022
  %v2058 = vpack.c.bf16 %v2025, %v2024
  %v2059 = vpack.c.bf16 %v2027, %v2026
  %v2092 = vunpack.c.l.b16 %v2028
  %v2093 = vunpack.c.h.b16 %v2028
  %v2094 = vunpack.c.l.b16 %v2029
  %v2095 = vunpack.c.h.b16 %v2029
  %v2096 = vunpack.c.l.b16 %v2030
  %v2097 = vunpack.c.h.b16 %v2030
  %v2098 = vunpack.c.l.b16 %v2031
  %v2099 = vunpack.c.h.b16 %v2031
  %v2100 = vunpack.c.l.b16 %v2032
  %v2101 = vunpack.c.h.b16 %v2032
  %v2102 = vunpack.c.l.b16 %v2033
  %v2103 = vunpack.c.h.b16 %v2033
  %v2104 = vunpack.c.l.b16 %v2034
  %v2105 = vunpack.c.h.b16 %v2034
  %v2106 = vunpack.c.l.b16 %v2035
  %v2107 = vunpack.c.h.b16 %v2035
  %v2108 = vunpack.c.l.b16 %v2036
  %v2109 = vunpack.c.h.b16 %v2036
  %v2110 = vunpack.c.l.b16 %v2037
  %v2111 = vunpack.c.h.b16 %v2037
  %v2112 = vunpack.c.l.b16 %v2038
  %v2113 = vunpack.c.h.b16 %v2038
  %v2114 = vunpack.c.l.b16 %v2039
  %v2115 = vunpack.c.h.b16 %v2039
  %v2116 = vunpack.c.l.b16 %v2040
  %v2117 = vunpack.c.h.b16 %v2040
  %v2118 = vunpack.c.l.b16 %v2041
  %v2119 = vunpack.c.h.b16 %v2041
  %v2120 = vunpack.c.l.b16 %v2042
  %v2121 = vunpack.c.h.b16 %v2042
  %v2122 = vunpack.c.l.b16 %v2043
  %v2123 = vunpack.c.h.b16 %v2043
  %v2124 = vunpack.c.l.b16 %v2044
  %v2125 = vunpack.c.h.b16 %v2044
  %v2126 = vunpack.c.l.b16 %v2045
  %v2127 = vunpack.c.h.b16 %v2045
  %v2128 = vunpack.c.l.b16 %v2046
  %v2129 = vunpack.c.h.b16 %v2046
  %v2130 = vunpack.c.l.b16 %v2047
  %v2131 = vunpack.c.h.b16 %v2047
  %v2132 = vunpack.c.l.b16 %v2048
  %v2133 = vunpack.c.h.b16 %v2048
  %v2134 = vunpack.c.l.b16 %v2049
  %v2135 = vunpack.c.h.b16 %v2049
  %v2136 = vunpack.c.l.b16 %v2050
  %v2137 = vunpack.c.h.b16 %v2050
  %v2138 = vunpack.c.l.b16 %v2051
  %v2139 = vunpack.c.h.b16 %v2051
  %v2140 = vunpack.c.l.b16 %v2052
  %v2141 = vunpack.c.h.b16 %v2052
  %v2142 = vunpack.c.l.b16 %v2053
  %v2143 = vunpack.c.h.b16 %v2053
  %v2144 = vunpack.c.l.b16 %v2054
  %v2145 = vunpack.c.h.b16 %v2054
  %v2146 = vunpack.c.l.b16 %v2055
  %v2147 = vunpack.c.h.b16 %v2055
  %v2148 = vunpack.c.l.b16 %v2056
  %v2149 = vunpack.c.h.b16 %v2056
  %v2150 = vunpack.c.l.b16 %v2057
  %v2151 = vunpack.c.h.b16 %v2057
  %v2152 = vunpack.c.l.b16 %v2058
  %v2153 = vunpack.c.h.b16 %v2058
  %v2154 = vunpack.c.l.b16 %v2059
  %v2155 = vunpack.c.h.b16 %v2059
  %v2156 = vpack.c.b16 %v2092, %v2092
  %v2157 = vpack.c.b16 %v2093, %v2093
  %v2158 = vpack.c.b16 %v2094, %v2094
  %v2159 = vpack.c.b16 %v2095, %v2095
  %v2160 = vpack.c.b16 %v2096, %v2096
  %v2161 = vpack.c.b16 %v2097, %v2097
  %v2162 = vpack.c.b16 %v2098, %v2098
  %v2163 = vpack.c.b16 %v2099, %v2099
  %v2164 = vpack.c.b16 %v2100, %v2100
  %v2165 = vpack.c.b16 %v2101, %v2101
  %v2166 = vpack.c.b16 %v2102, %v2102
  %v2167 = vpack.c.b16 %v2103, %v2103
  %v2168 = vpack.c.b16 %v2104, %v2104
  %v2169 = vpack.c.b16 %v2105, %v2105
  %v2170 = vpack.c.b16 %v2106, %v2106
  %v2171 = vpack.c.b16 %v2107, %v2107
  %v2172 = vpack.c.b16 %v2108, %v2108
  %v2173 = vpack.c.b16 %v2109, %v2109
  %v2174 = vpack.c.b16 %v2110, %v2110
  %v2175 = vpack.c.b16 %v2111, %v2111
  %v2176 = vpack.c.b16 %v2112, %v2112
  %v2177 = vpack.c.b16 %v2113, %v2113
  %v2178 = vpack.c.b16 %v2114, %v2114
  %v2179 = vpack.c.b16 %v2115, %v2115
  %v2180 = vpack.c.b16 %v2116, %v2116
  %v2181 = vpack.c.b16 %v2117, %v2117
  %v2182 = vpack.c.b16 %v2118, %v2118
  %v2183 = vpack.c.b16 %v2119, %v2119
  %v2184 = vpack.c.b16 %v2120, %v2120
  %v2185 = vpack.c.b16 %v2121, %v2121
  %v2186 = vpack.c.b16 %v2122, %v2122
  %v2187 = vpack.c.b16 %v2123, %v2123
  %v2188 = vpack.c.b16 %v2124, %v2124
  %v2189 = vpack.c.b16 %v2125, %v2125
  %v2190 = vpack.c.b16 %v2126, %v2126
  %v2191 = vpack.c.b16 %v2127, %v2127
  %v2192 = vpack.c.b16 %v2128, %v2128
  %v2193 = vpack.c.b16 %v2129, %v2129
  %v2194 = vpack.c.b16 %v2130, %v2130
  %v2195 = vpack.c.b16 %v2131, %v2131
  %v2196 = vpack.c.b16 %v2132, %v2132
  %v2197 = vpack.c.b16 %v2133, %v2133
  %v2198 = vpack.c.b16 %v2134, %v2134
  %v2199 = vpack.c.b16 %v2135, %v2135
  %v2200 = vpack.c.b16 %v2136, %v2136
  %v2201 = vpack.c.b16 %v2137, %v2137
  %v2202 = vpack.c.b16 %v2138, %v2138
  %v2203 = vpack.c.b16 %v2139, %v2139
  %v2204 = vpack.c.b16 %v2140, %v2140
  %v2205 = vpack.c.b16 %v2141, %v2141
  %v2206 = vpack.c.b16 %v2142, %v2142
  %v2207 = vpack.c.b16 %v2143, %v2143
  %v2208 = vpack.c.b16 %v2144, %v2144
  %v2209 = vpack.c.b16 %v2145, %v2145
  %v2210 = vpack.c.b16 %v2146, %v2146
  %v2211 = vpack.c.b16 %v2147, %v2147
  %v2212 = vpack.c.b16 %v2148, %v2148
  %v2213 = vpack.c.b16 %v2149, %v2149
  %v2214 = vpack.c.b16 %v2150, %v2150
  %v2215 = vpack.c.b16 %v2151, %v2151
  %v2216 = vpack.c.b16 %v2152, %v2152
  %v2217 = vpack.c.b16 %v2153, %v2153
  %v2218 = vpack.c.b16 %v2154, %v2154
  %v2219 = vpack.c.b16 %v2155, %v2155
  %vm2284 = vcmask 257024
  %2285 = vst.msk [vmem:[%s8] sm:$0xf] %vm2284, %v2156
  %2286 = vst.msk [vmem:[%s8 + $0x4] sm:$0xf] %vm2284, %v2157
  %2287 = vst.msk [vmem:[%s8 + $0x8] sm:$0xf] %vm2284, %v2158
  %2288 = vst.msk [vmem:[%s8 + $0xc] sm:$0xf] %vm2284, %v2159
  %2289 = vst.msk [vmem:[%s8 + $0x10] sm:$0xf] %vm2284, %v2160
  %2290 = vst.msk [vmem:[%s8 + $0x14] sm:$0xf] %vm2284, %v2161
  %2291 = vst.msk [vmem:[%s8 + $0x18] sm:$0xf] %vm2284, %v2162
  %2292 = vst.msk [vmem:[%s8 + $0x1c] sm:$0xf] %vm2284, %v2163
  %2293 = vst.msk [vmem:[%s8 + $0x20] sm:$0xf] %vm2284, %v2164
  %2294 = vst.msk [vmem:[%s8 + $0x24] sm:$0xf] %vm2284, %v2165
  %2295 = vst.msk [vmem:[%s8 + $0x28] sm:$0xf] %vm2284, %v2166
  %2296 = vst.msk [vmem:[%s8 + $0x2c] sm:$0xf] %vm2284, %v2167
  %2297 = vst.msk [vmem:[%s8 + $0x30] sm:$0xf] %vm2284, %v2168
  %2298 = vst.msk [vmem:[%s8 + $0x34] sm:$0xf] %vm2284, %v2169
  %2299 = vst.msk [vmem:[%s8 + $0x38] sm:$0xf] %vm2284, %v2170
  %2300 = vst.msk [vmem:[%s8 + $0x3c] sm:$0xf] %vm2284, %v2171
  %2301 = vst.msk [vmem:[%s8 + $0x40] sm:$0xf] %vm2284, %v2172
  %2302 = vst.msk [vmem:[%s8 + $0x44] sm:$0xf] %vm2284, %v2173
  %2303 = vst.msk [vmem:[%s8 + $0x48] sm:$0xf] %vm2284, %v2174
  %2304 = vst.msk [vmem:[%s8 + $0x4c] sm:$0xf] %vm2284, %v2175
  %2305 = vst.msk [vmem:[%s8 + $0x50] sm:$0xf] %vm2284, %v2176
  %2306 = vst.msk [vmem:[%s8 + $0x54] sm:$0xf] %vm2284, %v2177
  %2307 = vst.msk [vmem:[%s8 + $0x58] sm:$0xf] %vm2284, %v2178
  %2308 = vst.msk [vmem:[%s8 + $0x5c] sm:$0xf] %vm2284, %v2179
  %2309 = vst.msk [vmem:[%s8 + $0x60] sm:$0xf] %vm2284, %v2180
  %2310 = vst.msk [vmem:[%s8 + $0x64] sm:$0xf] %vm2284, %v2181
  %2311 = vst.msk [vmem:[%s8 + $0x68] sm:$0xf] %vm2284, %v2182
  %2312 = vst.msk [vmem:[%s8 + $0x6c] sm:$0xf] %vm2284, %v2183
  %2313 = vst.msk [vmem:[%s8 + $0x70] sm:$0xf] %vm2284, %v2184
  %2314 = vst.msk [vmem:[%s8 + $0x74] sm:$0xf] %vm2284, %v2185
  %2315 = vst.msk [vmem:[%s8 + $0x78] sm:$0xf] %vm2284, %v2186
  %2316 = vst.msk [vmem:[%s8 + $0x7c] sm:$0xf] %vm2284, %v2187
  %2317 = vst.msk [vmem:[%s8 + $0x80] sm:$0xf] %vm2284, %v2188
  %2318 = vst.msk [vmem:[%s8 + $0x84] sm:$0xf] %vm2284, %v2189
  %2319 = vst.msk [vmem:[%s8 + $0x88] sm:$0xf] %vm2284, %v2190
  %2320 = vst.msk [vmem:[%s8 + $0x8c] sm:$0xf] %vm2284, %v2191
  %2321 = vst.msk [vmem:[%s8 + $0x90] sm:$0xf] %vm2284, %v2192
  %2322 = vst.msk [vmem:[%s8 + $0x94] sm:$0xf] %vm2284, %v2193
  %2323 = vst.msk [vmem:[%s8 + $0x98] sm:$0xf] %vm2284, %v2194
  %2324 = vst.msk [vmem:[%s8 + $0x9c] sm:$0xf] %vm2284, %v2195
  %2325 = vst.msk [vmem:[%s8 + $0xa0] sm:$0xf] %vm2284, %v2196
  %2326 = vst.msk [vmem:[%s8 + $0xa4] sm:$0xf] %vm2284, %v2197
  %2327 = vst.msk [vmem:[%s8 + $0xa8] sm:$0xf] %vm2284, %v2198
  %2328 = vst.msk [vmem:[%s8 + $0xac] sm:$0xf] %vm2284, %v2199
  %2329 = vst.msk [vmem:[%s8 + $0xb0] sm:$0xf] %vm2284, %v2200
  %2330 = vst.msk [vmem:[%s8 + $0xb4] sm:$0xf] %vm2284, %v2201
  %2331 = vst.msk [vmem:[%s8 + $0xb8] sm:$0xf] %vm2284, %v2202
  %2332 = vst.msk [vmem:[%s8 + $0xbc] sm:$0xf] %vm2284, %v2203
  %2333 = vst.msk [vmem:[%s8 + $0xc0] sm:$0xf] %vm2284, %v2204
  %2334 = vst.msk [vmem:[%s8 + $0xc4] sm:$0xf] %vm2284, %v2205
  %2335 = vst.msk [vmem:[%s8 + $0xc8] sm:$0xf] %vm2284, %v2206
  %2336 = vst.msk [vmem:[%s8 + $0xcc] sm:$0xf] %vm2284, %v2207
  %2337 = vst.msk [vmem:[%s8 + $0xd0] sm:$0xf] %vm2284, %v2208
  %2338 = vst.msk [vmem:[%s8 + $0xd4] sm:$0xf] %vm2284, %v2209
  %2339 = vst.msk [vmem:[%s8 + $0xd8] sm:$0xf] %vm2284, %v2210
  %2340 = vst.msk [vmem:[%s8 + $0xdc] sm:$0xf] %vm2284, %v2211
  %2341 = vst.msk [vmem:[%s8 + $0xe0] sm:$0xf] %vm2284, %v2212
  %2342 = vst.msk [vmem:[%s8 + $0xe4] sm:$0xf] %vm2284, %v2213
  %2343 = vst.msk [vmem:[%s8 + $0xe8] sm:$0xf] %vm2284, %v2214
  %2344 = vst.msk [vmem:[%s8 + $0xec] sm:$0xf] %vm2284, %v2215
  %2345 = vst.msk [vmem:[%s8 + $0xf0] sm:$0xf] %vm2284, %v2216
  %2346 = vst.msk [vmem:[%s8 + $0xf4] sm:$0xf] %vm2284, %v2217
  %2347 = vst.msk [vmem:[%s8 + $0xf8] sm:$0xf] %vm2284, %v2218
  %2348 = vst.msk [vmem:[%s8 + $0xfc] sm:$0xf] %vm2284, %v2219
  %v2349 = vld [vmem:[%s6] sm:$0xf]
  %v2350 = vld [vmem:[%s6 + $0x4] sm:$0xf]
  %v2351 = vld [vmem:[%s6 + $0x8] sm:$0xf]
  %v2352 = vld [vmem:[%s6 + $0xc] sm:$0xf]
  %v2353 = vld [vmem:[%s7] sm:$0x1]
  %v2355 = vlaneseq
  %v2356 = vshrl.u32 %v2355, 7
  %v2357 = vsub.s32 0, %v2356
  %v2358 = vrot.slane %v2353, %v2357
  %v2364 = vunpack.c.l.b16 %v2349
  %v2365 = vunpack.c.l.b16 %v2350
  %v2366 = vunpack.c.l.b16 %v2351
  %v2367 = vunpack.c.l.b16 %v2352
  %v2368 = vpack.c.b16 %v2365, %v2364
  %v2369 = vpack.c.b16 %v2367, %v2366
  %vm2372 = vcmask 261120
  %v2374 = vsel %vm2372, %v2028, 0
  %v2377 = vsel %vm2372, %v2029, 0
  %v2380 = vsel %vm2372, %v2030, 0
  %v2383 = vsel %vm2372, %v2031, 0
  %v2386 = vsel %vm2372, %v2032, 0
  %v2389 = vsel %vm2372, %v2033, 0
  %v2392 = vsel %vm2372, %v2034, 0
  %v2395 = vsel %vm2372, %v2035, 0
  %v2398 = vsel %vm2372, %v2036, 0
  %v2401 = vsel %vm2372, %v2037, 0
  %v2404 = vsel %vm2372, %v2038, 0
  %v2407 = vsel %vm2372, %v2039, 0
  %v2410 = vsel %vm2372, %v2040, 0
  %v2413 = vsel %vm2372, %v2041, 0
  %v2416 = vsel %vm2372, %v2042, 0
  %v2419 = vsel %vm2372, %v2043, 0
  %v2422 = vsel %vm2372, %v2044, 0
  %v2425 = vsel %vm2372, %v2045, 0
  %v2428 = vsel %vm2372, %v2046, 0
  %v2431 = vsel %vm2372, %v2047, 0
  %v2434 = vsel %vm2372, %v2048, 0
  %v2437 = vsel %vm2372, %v2049, 0
  %v2440 = vsel %vm2372, %v2050, 0
  %v2443 = vsel %vm2372, %v2051, 0
  %v2446 = vsel %vm2372, %v2052, 0
  %v2449 = vsel %vm2372, %v2053, 0
  %v2452 = vsel %vm2372, %v2054, 0
  %v2455 = vsel %vm2372, %v2055, 0
  %v2458 = vsel %vm2372, %v2056, 0
  %v2461 = vsel %vm2372, %v2057, 0
  %v2464 = vsel %vm2372, %v2058, 0
  %v2467 = vsel %vm2372, %v2059, 0
  %2469 = vmatprep.subr.bf16.mxu0 0
  %2470 = vmatpush1.bf16.msra.mxu0 0
  %2471 = vmatprep.subr.bf16.mxu0 0
  %2472 = vmatpush1.bf16.msra.mxu0 0
  %2473 = vmatprep.subr.bf16.mxu0 0
  %2474 = vmatpush1.bf16.msra.mxu0 0
  %2475 = vmatprep.subr.bf16.mxu0 0
  %2476 = vmatpush1.bf16.msra.mxu0 0
  %2477 = vmatprep.subr.bf16.mxu0 0
  %2478 = vmatpush1.bf16.msra.mxu0 0
  %2479 = vmatprep.subr.bf16.mxu0 0
  %2480 = vmatpush1.bf16.msra.mxu0 0
  %2481 = vmatprep.subr.bf16.mxu0 0
  %2482 = vmatpush1.bf16.msra.mxu0 %v2369
  %2483 = vmatprep.subr.bf16.mxu0 0
  %2484 = vmatpush1.bf16.msra.mxu0 %v2368
  %2485 = vmatprep.subr.bf16.mxu0 0
  %2486 = vmatpush2.bf16.msra.mxu0 0
  %2487 = vmatprep.subr.bf16.mxu0 0
  %2488 = vmatpush2.bf16.msra.mxu0 0
  %2489 = vmatprep.subr.bf16.mxu0 0
  %2490 = vmatpush2.bf16.msra.mxu0 0
  %2491 = vmatprep.subr.bf16.mxu0 0
  %2492 = vmatpush2.bf16.msra.mxu0 0
  %2493 = vmatprep.subr.bf16.mxu0 0
  %2494 = vmatpush2.bf16.msra.mxu0 0
  %2495 = vmatprep.subr.bf16.mxu0 0
  %2496 = vmatpush2.bf16.msra.mxu0 0
  %2497 = vmatprep.subr.bf16.mxu0 0
  %2498 = vmatpush2.bf16.msra.mxu0 0
  %2499 = vmatprep.subr.bf16.mxu0 0
  %2500 = vmatpush2.bf16.msra.mxu0 0
  %2501 = vmatprep.mubr.bf16.mxu0 0
  %2502 = vmatmul.mubr.bf16.gmra.mxu0 %v2374
  %v2503 = vpop.f32.mrf.mxu0
  %v2504 = vadd.f32 %v2358, %v2503
  %v2505 = vpop.f32.mrf.mxu0
  %v2506 = vpop.f32.mrf.mxu0
  %v2507 = vadd.f32 %v2358, %v2506
  %v2508 = vpop.f32.mrf.mxu0
  %2509 = vmatprep.mubr.bf16.mxu0 0
  %2510 = vmatmul.mubr.bf16.gmra.mxu0 %v2377
  %v2511 = vpop.f32.mrf.mxu0
  %v2512 = vadd.f32 %v2358, %v2511
  %v2513 = vpop.f32.mrf.mxu0
  %v2514 = vpop.f32.mrf.mxu0
  %v2515 = vadd.f32 %v2358, %v2514
  %v2516 = vpop.f32.mrf.mxu0
  %2517 = vmatprep.mubr.bf16.mxu0 0
  %2518 = vmatmul.mubr.bf16.gmra.mxu0 %v2380
  %v2519 = vpop.f32.mrf.mxu0
  %v2520 = vadd.f32 %v2358, %v2519
  %v2521 = vpop.f32.mrf.mxu0
  %v2522 = vpop.f32.mrf.mxu0
  %v2523 = vadd.f32 %v2358, %v2522
  %v2524 = vpop.f32.mrf.mxu0
  %2525 = vmatprep.mubr.bf16.mxu0 0
  %2526 = vmatmul.mubr.bf16.gmra.mxu0 %v2383
  %v2527 = vpop.f32.mrf.mxu0
  %v2528 = vadd.f32 %v2358, %v2527
  %v2529 = vpop.f32.mrf.mxu0
  %v2530 = vpop.f32.mrf.mxu0
  %v2531 = vadd.f32 %v2358, %v2530
  %v2532 = vpop.f32.mrf.mxu0
  %2533 = vmatprep.mubr.bf16.mxu0 0
  %2534 = vmatmul.mubr.bf16.gmra.mxu0 %v2386
  %v2535 = vpop.f32.mrf.mxu0
  %v2536 = vadd.f32 %v2358, %v2535
  %v2537 = vpop.f32.mrf.mxu0
  %v2538 = vpop.f32.mrf.mxu0
  %v2539 = vadd.f32 %v2358, %v2538
  %v2540 = vpop.f32.mrf.mxu0
  %2541 = vmatprep.mubr.bf16.mxu0 0
  %2542 = vmatmul.mubr.bf16.gmra.mxu0 %v2389
  %v2543 = vpop.f32.mrf.mxu0
  %v2544 = vadd.f32 %v2358, %v2543
  %v2545 = vpop.f32.mrf.mxu0
  %v2546 = vpop.f32.mrf.mxu0
  %v2547 = vadd.f32 %v2358, %v2546
  %v2548 = vpop.f32.mrf.mxu0
  %2549 = vmatprep.mubr.bf16.mxu0 0
  %2550 = vmatmul.mubr.bf16.gmra.mxu0 %v2392
  %v2551 = vpop.f32.mrf.mxu0
  %v2552 = vadd.f32 %v2358, %v2551
  %v2553 = vpop.f32.mrf.mxu0
  %v2554 = vpop.f32.mrf.mxu0
  %v2555 = vadd.f32 %v2358, %v2554
  %v2556 = vpop.f32.mrf.mxu0
  %2557 = vmatprep.mubr.bf16.mxu0 0
  %2558 = vmatmul.mubr.bf16.gmra.mxu0 %v2395
  %v2559 = vpop.f32.mrf.mxu0
  %v2560 = vadd.f32 %v2358, %v2559
  %v2561 = vpop.f32.mrf.mxu0
  %v2562 = vpop.f32.mrf.mxu0
  %v2563 = vadd.f32 %v2358, %v2562
  %v2564 = vpop.f32.mrf.mxu0
  %2565 = vmatprep.mubr.bf16.mxu0 0
  %2566 = vmatmul.mubr.bf16.gmra.mxu0 %v2398
  %v2567 = vpop.f32.mrf.mxu0
  %v2568 = vadd.f32 %v2358, %v2567
  %v2569 = vpop.f32.mrf.mxu0
  %v2570 = vpop.f32.mrf.mxu0
  %v2571 = vadd.f32 %v2358, %v2570
  %v2572 = vpop.f32.mrf.mxu0
  %2573 = vmatprep.mubr.bf16.mxu0 0
  %2574 = vmatmul.mubr.bf16.gmra.mxu0 %v2401
  %v2575 = vpop.f32.mrf.mxu0
  %v2576 = vadd.f32 %v2358, %v2575
  %v2577 = vpop.f32.mrf.mxu0
  %v2578 = vpop.f32.mrf.mxu0
  %v2579 = vadd.f32 %v2358, %v2578
  %v2580 = vpop.f32.mrf.mxu0
  %2581 = vmatprep.mubr.bf16.mxu0 0
  %2582 = vmatmul.mubr.bf16.gmra.mxu0 %v2404
  %v2583 = vpop.f32.mrf.mxu0
  %v2584 = vadd.f32 %v2358, %v2583
  %v2585 = vpop.f32.mrf.mxu0
  %v2586 = vpop.f32.mrf.mxu0
  %v2587 = vadd.f32 %v2358, %v2586
  %v2588 = vpop.f32.mrf.mxu0
  %2589 = vmatprep.mubr.bf16.mxu0 0
  %2590 = vmatmul.mubr.bf16.gmra.mxu0 %v2407
  %v2591 = vpop.f32.mrf.mxu0
  %v2592 = vadd.f32 %v2358, %v2591
  %v2593 = vpop.f32.mrf.mxu0
  %v2594 = vpop.f32.mrf.mxu0
  %v2595 = vadd.f32 %v2358, %v2594
  %v2596 = vpop.f32.mrf.mxu0
  %2597 = vmatprep.mubr.bf16.mxu0 0
  %2598 = vmatmul.mubr.bf16.gmra.mxu0 %v2410
  %v2599 = vpop.f32.mrf.mxu0
  %v2600 = vadd.f32 %v2358, %v2599
  %v2601 = vpop.f32.mrf.mxu0
  %v2602 = vpop.f32.mrf.mxu0
  %v2603 = vadd.f32 %v2358, %v2602
  %v2604 = vpop.f32.mrf.mxu0
  %2605 = vmatprep.mubr.bf16.mxu0 0
  %2606 = vmatmul.mubr.bf16.gmra.mxu0 %v2413
  %v2607 = vpop.f32.mrf.mxu0
  %v2608 = vadd.f32 %v2358, %v2607
  %v2609 = vpop.f32.mrf.mxu0
  %v2610 = vpop.f32.mrf.mxu0
  %v2611 = vadd.f32 %v2358, %v2610
  %v2612 = vpop.f32.mrf.mxu0
  %2613 = vmatprep.mubr.bf16.mxu0 0
  %2614 = vmatmul.mubr.bf16.gmra.mxu0 %v2416
  %v2615 = vpop.f32.mrf.mxu0
  %v2616 = vadd.f32 %v2358, %v2615
  %v2617 = vpop.f32.mrf.mxu0
  %v2618 = vpop.f32.mrf.mxu0
  %v2619 = vadd.f32 %v2358, %v2618
  %v2620 = vpop.f32.mrf.mxu0
  %2621 = vmatprep.mubr.bf16.mxu0 0
  %2622 = vmatmul.mubr.bf16.gmra.mxu0 %v2419
  %v2623 = vpop.f32.mrf.mxu0
  %v2624 = vadd.f32 %v2358, %v2623
  %v2625 = vpop.f32.mrf.mxu0
  %v2626 = vpop.f32.mrf.mxu0
  %v2627 = vadd.f32 %v2358, %v2626
  %v2628 = vpop.f32.mrf.mxu0
  %2629 = vmatprep.mubr.bf16.mxu0 0
  %2630 = vmatmul.mubr.bf16.gmra.mxu0 %v2422
  %v2631 = vpop.f32.mrf.mxu0
  %v2632 = vadd.f32 %v2358, %v2631
  %v2633 = vpop.f32.mrf.mxu0
  %v2634 = vpop.f32.mrf.mxu0
  %v2635 = vadd.f32 %v2358, %v2634
  %v2636 = vpop.f32.mrf.mxu0
  %2637 = vmatprep.mubr.bf16.mxu0 0
  %2638 = vmatmul.mubr.bf16.gmra.mxu0 %v2425
  %v2639 = vpop.f32.mrf.mxu0
  %v2640 = vadd.f32 %v2358, %v2639
  %v2641 = vpop.f32.mrf.mxu0
  %v2642 = vpop.f32.mrf.mxu0
  %v2643 = vadd.f32 %v2358, %v2642
  %v2644 = vpop.f32.mrf.mxu0
  %2645 = vmatprep.mubr.bf16.mxu0 0
  %2646 = vmatmul.mubr.bf16.gmra.mxu0 %v2428
  %v2647 = vpop.f32.mrf.mxu0
  %v2648 = vadd.f32 %v2358, %v2647
  %v2649 = vpop.f32.mrf.mxu0
  %v2650 = vpop.f32.mrf.mxu0
  %v2651 = vadd.f32 %v2358, %v2650
  %v2652 = vpop.f32.mrf.mxu0
  %2653 = vmatprep.mubr.bf16.mxu0 0
  %2654 = vmatmul.mubr.bf16.gmra.mxu0 %v2431
  %v2655 = vpop.f32.mrf.mxu0
  %v2656 = vadd.f32 %v2358, %v2655
  %v2657 = vpop.f32.mrf.mxu0
  %v2658 = vpop.f32.mrf.mxu0
  %v2659 = vadd.f32 %v2358, %v2658
  %v2660 = vpop.f32.mrf.mxu0
  %2661 = vmatprep.mubr.bf16.mxu0 0
  %2662 = vmatmul.mubr.bf16.gmra.mxu0 %v2434
  %v2663 = vpop.f32.mrf.mxu0
  %v2664 = vadd.f32 %v2358, %v2663
  %v2665 = vpop.f32.mrf.mxu0
  %v2666 = vpop.f32.mrf.mxu0
  %v2667 = vadd.f32 %v2358, %v2666
  %v2668 = vpop.f32.mrf.mxu0
  %2669 = vmatprep.mubr.bf16.mxu0 0
  %2670 = vmatmul.mubr.bf16.gmra.mxu0 %v2437
  %v2671 = vpop.f32.mrf.mxu0
  %v2672 = vadd.f32 %v2358, %v2671
  %v2673 = vpop.f32.mrf.mxu0
  %v2674 = vpop.f32.mrf.mxu0
  %v2675 = vadd.f32 %v2358, %v2674
  %v2676 = vpop.f32.mrf.mxu0
  %2677 = vmatprep.mubr.bf16.mxu0 0
  %2678 = vmatmul.mubr.bf16.gmra.mxu0 %v2440
  %v2679 = vpop.f32.mrf.mxu0
  %v2680 = vadd.f32 %v2358, %v2679
  %v2681 = vpop.f32.mrf.mxu0
  %v2682 = vpop.f32.mrf.mxu0
  %v2683 = vadd.f32 %v2358, %v2682
  %v2684 = vpop.f32.mrf.mxu0
  %2685 = vmatprep.mubr.bf16.mxu0 0
  %2686 = vmatmul.mubr.bf16.gmra.mxu0 %v2443
  %v2687 = vpop.f32.mrf.mxu0
  %v2688 = vadd.f32 %v2358, %v2687
  %v2689 = vpop.f32.mrf.mxu0
  %v2690 = vpop.f32.mrf.mxu0
  %v2691 = vadd.f32 %v2358, %v2690
  %v2692 = vpop.f32.mrf.mxu0
  %2693 = vmatprep.mubr.bf16.mxu0 0
  %2694 = vmatmul.mubr.bf16.gmra.mxu0 %v2446
  %v2695 = vpop.f32.mrf.mxu0
  %v2696 = vadd.f32 %v2358, %v2695
  %v2697 = vpop.f32.mrf.mxu0
  %v2698 = vpop.f32.mrf.mxu0
  %v2699 = vadd.f32 %v2358, %v2698
  %v2700 = vpop.f32.mrf.mxu0
  %2701 = vmatprep.mubr.bf16.mxu0 0
  %2702 = vmatmul.mubr.bf16.gmra.mxu0 %v2449
  %v2703 = vpop.f32.mrf.mxu0
  %v2704 = vadd.f32 %v2358, %v2703
  %v2705 = vpop.f32.mrf.mxu0
  %v2706 = vpop.f32.mrf.mxu0
  %v2707 = vadd.f32 %v2358, %v2706
  %v2708 = vpop.f32.mrf.mxu0
  %2709 = vmatprep.mubr.bf16.mxu0 0
  %2710 = vmatmul.mubr.bf16.gmra.mxu0 %v2452
  %v2711 = vpop.f32.mrf.mxu0
  %v2712 = vadd.f32 %v2358, %v2711
  %v2713 = vpop.f32.mrf.mxu0
  %v2714 = vpop.f32.mrf.mxu0
  %v2715 = vadd.f32 %v2358, %v2714
  %v2716 = vpop.f32.mrf.mxu0
  %2717 = vmatprep.mubr.bf16.mxu0 0
  %2718 = vmatmul.mubr.bf16.gmra.mxu0 %v2455
  %v2719 = vpop.f32.mrf.mxu0
  %v2720 = vadd.f32 %v2358, %v2719
  %v2721 = vpop.f32.mrf.mxu0
  %v2722 = vpop.f32.mrf.mxu0
  %v2723 = vadd.f32 %v2358, %v2722
  %v2724 = vpop.f32.mrf.mxu0
  %2725 = vmatprep.mubr.bf16.mxu0 0
  %2726 = vmatmul.mubr.bf16.gmra.mxu0 %v2458
  %v2727 = vpop.f32.mrf.mxu0
  %v2728 = vadd.f32 %v2358, %v2727
  %v2729 = vpop.f32.mrf.mxu0
  %v2730 = vpop.f32.mrf.mxu0
  %v2731 = vadd.f32 %v2358, %v2730
  %v2732 = vpop.f32.mrf.mxu0
  %2733 = vmatprep.mubr.bf16.mxu0 0
  %2734 = vmatmul.mubr.bf16.gmra.mxu0 %v2461
  %v2735 = vpop.f32.mrf.mxu0
  %v2736 = vadd.f32 %v2358, %v2735
  %v2737 = vpop.f32.mrf.mxu0
  %v2738 = vpop.f32.mrf.mxu0
  %v2739 = vadd.f32 %v2358, %v2738
  %v2740 = vpop.f32.mrf.mxu0
  %2741 = vmatprep.mubr.bf16.mxu0 0
  %2742 = vmatmul.mubr.bf16.gmra.mxu0 %v2464
  %v2743 = vpop.f32.mrf.mxu0
  %v2744 = vadd.f32 %v2358, %v2743
  %v2745 = vpop.f32.mrf.mxu0
  %v2746 = vpop.f32.mrf.mxu0
  %v2747 = vadd.f32 %v2358, %v2746
  %v2748 = vpop.f32.mrf.mxu0
  %2749 = vmatprep.mubr.bf16.mxu0 0
  %2750 = vmatmul.mubr.bf16.gmra.mxu0 %v2467
  %v2751 = vpop.f32.mrf.mxu0
  %v2752 = vadd.f32 %v2358, %v2751
  %v2753 = vpop.f32.mrf.mxu0
  %v2754 = vpop.f32.mrf.mxu0
  %v2755 = vadd.f32 %v2358, %v2754
  %v2756 = vpop.f32.mrf.mxu0
  %2757 = vdwg.mxu0
  %v2758 = vmax.f32 %v2504, 0.0
  %v2759 = vmax.f32 %v2507, 0.0
  %v2760 = vmax.f32 %v2512, 0.0
  %v2761 = vmax.f32 %v2515, 0.0
  %v2762 = vmax.f32 %v2520, 0.0
  %v2763 = vmax.f32 %v2523, 0.0
  %v2764 = vmax.f32 %v2528, 0.0
  %v2765 = vmax.f32 %v2531, 0.0
  %v2766 = vmax.f32 %v2536, 0.0
  %v2767 = vmax.f32 %v2539, 0.0
  %v2768 = vmax.f32 %v2544, 0.0
  %v2769 = vmax.f32 %v2547, 0.0
  %v2770 = vmax.f32 %v2552, 0.0
  %v2771 = vmax.f32 %v2555, 0.0
  %v2772 = vmax.f32 %v2560, 0.0
  %v2773 = vmax.f32 %v2563, 0.0
  %v2774 = vmax.f32 %v2568, 0.0
  %v2775 = vmax.f32 %v2571, 0.0
  %v2776 = vmax.f32 %v2576, 0.0
  %v2777 = vmax.f32 %v2579, 0.0
  %v2778 = vmax.f32 %v2584, 0.0
  %v2779 = vmax.f32 %v2587, 0.0
  %v2780 = vmax.f32 %v2592, 0.0
  %v2781 = vmax.f32 %v2595, 0.0
  %v2782 = vmax.f32 %v2600, 0.0
  %v2783 = vmax.f32 %v2603, 0.0
  %v2784 = vmax.f32 %v2608, 0.0
  %v2785 = vmax.f32 %v2611, 0.0
  %v2786 = vmax.f32 %v2616, 0.0
  %v2787 = vmax.f32 %v2619, 0.0
  %v2788 = vmax.f32 %v2624, 0.0
  %v2789 = vmax.f32 %v2627, 0.0
  %v2790 = vmax.f32 %v2632, 0.0
  %v2791 = vmax.f32 %v2635, 0.0
  %v2792 = vmax.f32 %v2640, 0.0
  %v2793 = vmax.f32 %v2643, 0.0
  %v2794 = vmax.f32 %v2648, 0.0
  %v2795 = vmax.f32 %v2651, 0.0
  %v2796 = vmax.f32 %v2656, 0.0
  %v2797 = vmax.f32 %v2659, 0.0
  %v2798 = vmax.f32 %v2664, 0.0
  %v2799 = vmax.f32 %v2667, 0.0
  %v2800 = vmax.f32 %v2672, 0.0
  %v2801 = vmax.f32 %v2675, 0.0
  %v2802 = vmax.f32 %v2680, 0.0
  %v2803 = vmax.f32 %v2683, 0.0
  %v2804 = vmax.f32 %v2688, 0.0
  %v2805 = vmax.f32 %v2691, 0.0
  %v2806 = vmax.f32 %v2696, 0.0
  %v2807 = vmax.f32 %v2699, 0.0
  %v2808 = vmax.f32 %v2704, 0.0
  %v2809 = vmax.f32 %v2707, 0.0
  %v2810 = vmax.f32 %v2712, 0.0
  %v2811 = vmax.f32 %v2715, 0.0
  %v2812 = vmax.f32 %v2720, 0.0
  %v2813 = vmax.f32 %v2723, 0.0
  %v2814 = vmax.f32 %v2728, 0.0
  %v2815 = vmax.f32 %v2731, 0.0
  %v2816 = vmax.f32 %v2736, 0.0
  %v2817 = vmax.f32 %v2739, 0.0
  %v2818 = vmax.f32 %v2744, 0.0
  %v2819 = vmax.f32 %v2747, 0.0
  %v2820 = vmax.f32 %v2752, 0.0
  %v2821 = vmax.f32 %v2755, 0.0
  %v2822 = vpack.c.bf16 %v2759, %v2758
  %v2823 = vpack.c.bf16 %v2761, %v2760
  %v2824 = vpack.c.bf16 %v2763, %v2762
  %v2825 = vpack.c.bf16 %v2765, %v2764
  %v2826 = vpack.c.bf16 %v2767, %v2766
  %v2827 = vpack.c.bf16 %v2769, %v2768
  %v2828 = vpack.c.bf16 %v2771, %v2770
  %v2829 = vpack.c.bf16 %v2773, %v2772
  %v2830 = vpack.c.bf16 %v2775, %v2774
  %v2831 = vpack.c.bf16 %v2777, %v2776
  %v2832 = vpack.c.bf16 %v2779, %v2778
  %v2833 = vpack.c.bf16 %v2781, %v2780
  %v2834 = vpack.c.bf16 %v2783, %v2782
  %v2835 = vpack.c.bf16 %v2785, %v2784
  %v2836 = vpack.c.bf16 %v2787, %v2786
  %v2837 = vpack.c.bf16 %v2789, %v2788
  %v2838 = vpack.c.bf16 %v2791, %v2790
  %v2839 = vpack.c.bf16 %v2793, %v2792
  %v2840 = vpack.c.bf16 %v2795, %v2794
  %v2841 = vpack.c.bf16 %v2797, %v2796
  %v2842 = vpack.c.bf16 %v2799, %v2798
  %v2843 = vpack.c.bf16 %v2801, %v2800
  %v2844 = vpack.c.bf16 %v2803, %v2802
  %v2845 = vpack.c.bf16 %v2805, %v2804
  %v2846 = vpack.c.bf16 %v2807, %v2806
  %v2847 = vpack.c.bf16 %v2809, %v2808
  %v2848 = vpack.c.bf16 %v2811, %v2810
  %v2849 = vpack.c.bf16 %v2813, %v2812
  %v2850 = vpack.c.bf16 %v2815, %v2814
  %v2851 = vpack.c.bf16 %v2817, %v2816
  %v2852 = vpack.c.bf16 %v2819, %v2818
  %v2853 = vpack.c.bf16 %v2821, %v2820
  %v2886 = vunpack.c.l.b16 %v2822
  %v2887 = vunpack.c.h.b16 %v2822
  %v2888 = vunpack.c.l.b16 %v2823
  %v2889 = vunpack.c.h.b16 %v2823
  %v2890 = vunpack.c.l.b16 %v2824
  %v2891 = vunpack.c.h.b16 %v2824
  %v2892 = vunpack.c.l.b16 %v2825
  %v2893 = vunpack.c.h.b16 %v2825
  %v2894 = vunpack.c.l.b16 %v2826
  %v2895 = vunpack.c.h.b16 %v2826
  %v2896 = vunpack.c.l.b16 %v2827
  %v2897 = vunpack.c.h.b16 %v2827
  %v2898 = vunpack.c.l.b16 %v2828
  %v2899 = vunpack.c.h.b16 %v2828
  %v2900 = vunpack.c.l.b16 %v2829
  %v2901 = vunpack.c.h.b16 %v2829
  %v2902 = vunpack.c.l.b16 %v2830
  %v2903 = vunpack.c.h.b16 %v2830
  %v2904 = vunpack.c.l.b16 %v2831
  %v2905 = vunpack.c.h.b16 %v2831
  %v2906 = vunpack.c.l.b16 %v2832
  %v2907 = vunpack.c.h.b16 %v2832
  %v2908 = vunpack.c.l.b16 %v2833
  %v2909 = vunpack.c.h.b16 %v2833
  %v2910 = vunpack.c.l.b16 %v2834
  %v2911 = vunpack.c.h.b16 %v2834
  %v2912 = vunpack.c.l.b16 %v2835
  %v2913 = vunpack.c.h.b16 %v2835
  %v2914 = vunpack.c.l.b16 %v2836
  %v2915 = vunpack.c.h.b16 %v2836
  %v2916 = vunpack.c.l.b16 %v2837
  %v2917 = vunpack.c.h.b16 %v2837
  %v2918 = vunpack.c.l.b16 %v2838
  %v2919 = vunpack.c.h.b16 %v2838
  %v2920 = vunpack.c.l.b16 %v2839
  %v2921 = vunpack.c.h.b16 %v2839
  %v2922 = vunpack.c.l.b16 %v2840
  %v2923 = vunpack.c.h.b16 %v2840
  %v2924 = vunpack.c.l.b16 %v2841
  %v2925 = vunpack.c.h.b16 %v2841
  %v2926 = vunpack.c.l.b16 %v2842
  %v2927 = vunpack.c.h.b16 %v2842
  %v2928 = vunpack.c.l.b16 %v2843
  %v2929 = vunpack.c.h.b16 %v2843
  %v2930 = vunpack.c.l.b16 %v2844
  %v2931 = vunpack.c.h.b16 %v2844
  %v2932 = vunpack.c.l.b16 %v2845
  %v2933 = vunpack.c.h.b16 %v2845
  %v2934 = vunpack.c.l.b16 %v2846
  %v2935 = vunpack.c.h.b16 %v2846
  %v2936 = vunpack.c.l.b16 %v2847
  %v2937 = vunpack.c.h.b16 %v2847
  %v2938 = vunpack.c.l.b16 %v2848
  %v2939 = vunpack.c.h.b16 %v2848
  %v2940 = vunpack.c.l.b16 %v2849
  %v2941 = vunpack.c.h.b16 %v2849
  %v2942 = vunpack.c.l.b16 %v2850
  %v2943 = vunpack.c.h.b16 %v2850
  %v2944 = vunpack.c.l.b16 %v2851
  %v2945 = vunpack.c.h.b16 %v2851
  %v2946 = vunpack.c.l.b16 %v2852
  %v2947 = vunpack.c.h.b16 %v2852
  %v2948 = vunpack.c.l.b16 %v2853
  %v2949 = vunpack.c.h.b16 %v2853
  %v2950 = vpack.c.b16 %v2886, %v2886
  %v2951 = vpack.c.b16 %v2887, %v2887
  %v2952 = vpack.c.b16 %v2888, %v2888
  %v2953 = vpack.c.b16 %v2889, %v2889
  %v2954 = vpack.c.b16 %v2890, %v2890
  %v2955 = vpack.c.b16 %v2891, %v2891
  %v2956 = vpack.c.b16 %v2892, %v2892
  %v2957 = vpack.c.b16 %v2893, %v2893
  %v2958 = vpack.c.b16 %v2894, %v2894
  %v2959 = vpack.c.b16 %v2895, %v2895
  %v2960 = vpack.c.b16 %v2896, %v2896
  %v2961 = vpack.c.b16 %v2897, %v2897
  %v2962 = vpack.c.b16 %v2898, %v2898
  %v2963 = vpack.c.b16 %v2899, %v2899
  %v2964 = vpack.c.b16 %v2900, %v2900
  %v2965 = vpack.c.b16 %v2901, %v2901
  %v2966 = vpack.c.b16 %v2902, %v2902
  %v2967 = vpack.c.b16 %v2903, %v2903
  %v2968 = vpack.c.b16 %v2904, %v2904
  %v2969 = vpack.c.b16 %v2905, %v2905
  %v2970 = vpack.c.b16 %v2906, %v2906
  %v2971 = vpack.c.b16 %v2907, %v2907
  %v2972 = vpack.c.b16 %v2908, %v2908
  %v2973 = vpack.c.b16 %v2909, %v2909
  %v2974 = vpack.c.b16 %v2910, %v2910
  %v2975 = vpack.c.b16 %v2911, %v2911
  %v2976 = vpack.c.b16 %v2912, %v2912
  %v2977 = vpack.c.b16 %v2913, %v2913
  %v2978 = vpack.c.b16 %v2914, %v2914
  %v2979 = vpack.c.b16 %v2915, %v2915
  %v2980 = vpack.c.b16 %v2916, %v2916
  %v2981 = vpack.c.b16 %v2917, %v2917
  %v2982 = vpack.c.b16 %v2918, %v2918
  %v2983 = vpack.c.b16 %v2919, %v2919
  %v2984 = vpack.c.b16 %v2920, %v2920
  %v2985 = vpack.c.b16 %v2921, %v2921
  %v2986 = vpack.c.b16 %v2922, %v2922
  %v2987 = vpack.c.b16 %v2923, %v2923
  %v2988 = vpack.c.b16 %v2924, %v2924
  %v2989 = vpack.c.b16 %v2925, %v2925
  %v2990 = vpack.c.b16 %v2926, %v2926
  %v2991 = vpack.c.b16 %v2927, %v2927
  %v2992 = vpack.c.b16 %v2928, %v2928
  %v2993 = vpack.c.b16 %v2929, %v2929
  %v2994 = vpack.c.b16 %v2930, %v2930
  %v2995 = vpack.c.b16 %v2931, %v2931
  %v2996 = vpack.c.b16 %v2932, %v2932
  %v2997 = vpack.c.b16 %v2933, %v2933
  %v2998 = vpack.c.b16 %v2934, %v2934
  %v2999 = vpack.c.b16 %v2935, %v2935
  %v3000 = vpack.c.b16 %v2936, %v2936
  %v3001 = vpack.c.b16 %v2937, %v2937
  %v3002 = vpack.c.b16 %v2938, %v2938
  %v3003 = vpack.c.b16 %v2939, %v2939
  %v3004 = vpack.c.b16 %v2940, %v2940
  %v3005 = vpack.c.b16 %v2941, %v2941
  %v3006 = vpack.c.b16 %v2942, %v2942
  %v3007 = vpack.c.b16 %v2943, %v2943
  %v3008 = vpack.c.b16 %v2944, %v2944
  %v3009 = vpack.c.b16 %v2945, %v2945
  %v3010 = vpack.c.b16 %v2946, %v2946
  %v3011 = vpack.c.b16 %v2947, %v2947
  %v3012 = vpack.c.b16 %v2948, %v2948
  %v3013 = vpack.c.b16 %v2949, %v2949
  %3078 = vst.msk [vmem:[%s9] sm:$0xf] %vm2284, %v2950
  %3079 = vst.msk [vmem:[%s9 + $0x4] sm:$0xf] %vm2284, %v2951
  %3080 = vst.msk [vmem:[%s9 + $0x8] sm:$0xf] %vm2284, %v2952
  %3081 = vst.msk [vmem:[%s9 + $0xc] sm:$0xf] %vm2284, %v2953
  %3082 = vst.msk [vmem:[%s9 + $0x10] sm:$0xf] %vm2284, %v2954
  %3083 = vst.msk [vmem:[%s9 + $0x14] sm:$0xf] %vm2284, %v2955
  %3084 = vst.msk [vmem:[%s9 + $0x18] sm:$0xf] %vm2284, %v2956
  %3085 = vst.msk [vmem:[%s9 + $0x1c] sm:$0xf] %vm2284, %v2957
  %3086 = vst.msk [vmem:[%s9 + $0x20] sm:$0xf] %vm2284, %v2958
  %3087 = vst.msk [vmem:[%s9 + $0x24] sm:$0xf] %vm2284, %v2959
  %3088 = vst.msk [vmem:[%s9 + $0x28] sm:$0xf] %vm2284, %v2960
  %3089 = vst.msk [vmem:[%s9 + $0x2c] sm:$0xf] %vm2284, %v2961
  %3090 = vst.msk [vmem:[%s9 + $0x30] sm:$0xf] %vm2284, %v2962
  %3091 = vst.msk [vmem:[%s9 + $0x34] sm:$0xf] %vm2284, %v2963
  %3092 = vst.msk [vmem:[%s9 + $0x38] sm:$0xf] %vm2284, %v2964
  %3093 = vst.msk [vmem:[%s9 + $0x3c] sm:$0xf] %vm2284, %v2965
  %3094 = vst.msk [vmem:[%s9 + $0x40] sm:$0xf] %vm2284, %v2966
  %3095 = vst.msk [vmem:[%s9 + $0x44] sm:$0xf] %vm2284, %v2967
  %3096 = vst.msk [vmem:[%s9 + $0x48] sm:$0xf] %vm2284, %v2968
  %3097 = vst.msk [vmem:[%s9 + $0x4c] sm:$0xf] %vm2284, %v2969
  %3098 = vst.msk [vmem:[%s9 + $0x50] sm:$0xf] %vm2284, %v2970
  %3099 = vst.msk [vmem:[%s9 + $0x54] sm:$0xf] %vm2284, %v2971
  %3100 = vst.msk [vmem:[%s9 + $0x58] sm:$0xf] %vm2284, %v2972
  %3101 = vst.msk [vmem:[%s9 + $0x5c] sm:$0xf] %vm2284, %v2973
  %3102 = vst.msk [vmem:[%s9 + $0x60] sm:$0xf] %vm2284, %v2974
  %3103 = vst.msk [vmem:[%s9 + $0x64] sm:$0xf] %vm2284, %v2975
  %3104 = vst.msk [vmem:[%s9 + $0x68] sm:$0xf] %vm2284, %v2976
  %3105 = vst.msk [vmem:[%s9 + $0x6c] sm:$0xf] %vm2284, %v2977
  %3106 = vst.msk [vmem:[%s9 + $0x70] sm:$0xf] %vm2284, %v2978
  %3107 = vst.msk [vmem:[%s9 + $0x74] sm:$0xf] %vm2284, %v2979
  %3108 = vst.msk [vmem:[%s9 + $0x78] sm:$0xf] %vm2284, %v2980
  %3109 = vst.msk [vmem:[%s9 + $0x7c] sm:$0xf] %vm2284, %v2981
  %3110 = vst.msk [vmem:[%s9 + $0x80] sm:$0xf] %vm2284, %v2982
  %3111 = vst.msk [vmem:[%s9 + $0x84] sm:$0xf] %vm2284, %v2983
  %3112 = vst.msk [vmem:[%s9 + $0x88] sm:$0xf] %vm2284, %v2984
  %3113 = vst.msk [vmem:[%s9 + $0x8c] sm:$0xf] %vm2284, %v2985
  %3114 = vst.msk [vmem:[%s9 + $0x90] sm:$0xf] %vm2284, %v2986
  %3115 = vst.msk [vmem:[%s9 + $0x94] sm:$0xf] %vm2284, %v2987
  %3116 = vst.msk [vmem:[%s9 + $0x98] sm:$0xf] %vm2284, %v2988
  %3117 = vst.msk [vmem:[%s9 + $0x9c] sm:$0xf] %vm2284, %v2989
  %3118 = vst.msk [vmem:[%s9 + $0xa0] sm:$0xf] %vm2284, %v2990
  %3119 = vst.msk [vmem:[%s9 + $0xa4] sm:$0xf] %vm2284, %v2991
  %3120 = vst.msk [vmem:[%s9 + $0xa8] sm:$0xf] %vm2284, %v2992
  %3121 = vst.msk [vmem:[%s9 + $0xac] sm:$0xf] %vm2284, %v2993
  %3122 = vst.msk [vmem:[%s9 + $0xb0] sm:$0xf] %vm2284, %v2994
  %3123 = vst.msk [vmem:[%s9 + $0xb4] sm:$0xf] %vm2284, %v2995
  %3124 = vst.msk [vmem:[%s9 + $0xb8] sm:$0xf] %vm2284, %v2996
  %3125 = vst.msk [vmem:[%s9 + $0xbc] sm:$0xf] %vm2284, %v2997
  %3126 = vst.msk [vmem:[%s9 + $0xc0] sm:$0xf] %vm2284, %v2998
  %3127 = vst.msk [vmem:[%s9 + $0xc4] sm:$0xf] %vm2284, %v2999
  %3128 = vst.msk [vmem:[%s9 + $0xc8] sm:$0xf] %vm2284, %v3000
  %3129 = vst.msk [vmem:[%s9 + $0xcc] sm:$0xf] %vm2284, %v3001
  %3130 = vst.msk [vmem:[%s9 + $0xd0] sm:$0xf] %vm2284, %v3002
  %3131 = vst.msk [vmem:[%s9 + $0xd4] sm:$0xf] %vm2284, %v3003
  %3132 = vst.msk [vmem:[%s9 + $0xd8] sm:$0xf] %vm2284, %v3004
  %3133 = vst.msk [vmem:[%s9 + $0xdc] sm:$0xf] %vm2284, %v3005
  %3134 = vst.msk [vmem:[%s9 + $0xe0] sm:$0xf] %vm2284, %v3006
  %3135 = vst.msk [vmem:[%s9 + $0xe4] sm:$0xf] %vm2284, %v3007
  %3136 = vst.msk [vmem:[%s9 + $0xe8] sm:$0xf] %vm2284, %v3008
  %3137 = vst.msk [vmem:[%s9 + $0xec] sm:$0xf] %vm2284, %v3009
  %3138 = vst.msk [vmem:[%s9 + $0xf0] sm:$0xf] %vm2284, %v3010
  %3139 = vst.msk [vmem:[%s9 + $0xf4] sm:$0xf] %vm2284, %v3011
  %3140 = vst.msk [vmem:[%s9 + $0xf8] sm:$0xf] %vm2284, %v3012
  %3141 = vst.msk [vmem:[%s9 + $0xfc] sm:$0xf] %vm2284, %v3013
  // Predicated region
  $region34: #{tpu_custom_call.1} parent=0 // pred_check
    _
  $region35: #{tpu_custom_call.1} parent=0 // pred_check_branch
    %3143 = sbr.rel (0) target = $region37
  $region36: #{tpu_custom_call.1} parent=0 // pred_region
    _
  $region37: #{tpu_custom_call.1} parent=0 // pred_fallthru
    _
  // Predicated region
  $region38: #{tpu_custom_call.1} parent=0 // pred_check
    _
  $region39: #{tpu_custom_call.1} parent=0 // pred_check_branch
    %3145 = sbr.rel (0) target = $region41
  $region40: #{tpu_custom_call.1} parent=0 // pred_region
    _
  $region41: #{tpu_custom_call.1} parent=0 // pred_fallthru
    _
  // Predicated region
  $region42: #{tpu_custom_call.1} parent=0 // pred_check
    _
  $region43: #{tpu_custom_call.1} parent=0 // pred_check_branch
    %3147 = sbr.rel (0) target = $region45
  $region44: #{tpu_custom_call.1} parent=0 // pred_region
    _
  $region45: #{tpu_custom_call.1} parent=0 // pred_fallthru
    _
  // Predicated region
  $region46: #{tpu_custom_call.1} parent=0 // pred_check
    _
  $region47: #{tpu_custom_call.1} parent=0 // pred_check_branch
    %3149 = sbr.rel (0) target = $region49
  $region48: #{tpu_custom_call.1} parent=0 // pred_region
    _
  $region49: #{tpu_custom_call.1} parent=0 // pred_fallthru
    _

</llo_original>
